<compile_context>
chip_gen: v7x
topology: tpu7x:2x2x1
jax: 0.10.0
libtpu: 0.0.40
codegen_flags: <defaults>
</compile_context>

<pallas_src>
import math

import jax
import jax.numpy as jnp
import numpy as np
from jax.experimental import pallas as pl
from jax.experimental.pallas import tpu as pltpu

# ----------------------------- config (small, synthetic) --------------------
MAX_LENGTH = 64              # max_length (tokens per sequence)
BATCH = 4                    # sequences per call (raise to >=8 for v7x: grid=(2,))
SEQS_PER_BLOCK = 4           # sequences per grid step -> M = 256 rows per step
ROWS_PER_BLOCK = SEQS_PER_BLOCK * MAX_LENGTH       # 256
VOCAB = 512                  # bert_word_embedding.num_embeddings (synthetic)
D_IN = 128                   # bert word-embedding dim (self.input_size)
E_DIM = 128                  # embedding_dim
K_CHUNK = 128                # vocab chunk per matmul (128 also fine on v5e)
EPS = 1e-5                   # nn.LayerNorm default eps
SCALE = math.sqrt(E_DIM)     # scale_factor default

assert VOCAB % K_CHUNK == 0


# ----------------------------- Pallas kernel --------------------------------
def text_embed_kernel(ids_ref, fused_t_ref, p_ref, o_ref):
    # ids_ref:     [1, ROWS]   int32  lane-dense token ids
    # fused_t_ref: [E, V]      bf16   (embedding table @ linear weight)^T
    # p_ref:       [8, E]      f32    row 0 = bias, row 1 = gamma*SCALE,
    #                                 row 2 = beta*SCALE (rows 3..7 padding)
    # o_ref:       [ROWS, E]   f32
    ids_row = ids_ref[...]                              # [1, ROWS] int32
    rows = ids_row.shape[1]
    e_dim = fused_t_ref.shape[0]
    vocab = fused_t_ref.shape[1]

    # Embedding lookup + Linear as a chunked one-hot matmul in transposed
    # orientation:  y^T[e, r] = sum_v fused^T[e, v] * one_hot^T[v, r]
    # one_hot^T is built natively from lane-dense ids (no ids relayout needed).
    acc_t = jnp.zeros((e_dim, rows), jnp.float32)       # [E, ROWS] f32
    for c in range(vocab // K_CHUNK):                   # fully unrolled, static offsets
        off = c * K_CHUNK
        iota_v = jax.lax.broadcasted_iota(jnp.int32, (K_CHUNK, rows), 0) + off
        one_hot_t = (iota_v == ids_row).astype(fused_t_ref.dtype)   # [CK, ROWS] bf16
        acc_t = acc_t + jnp.dot(fused_t_ref[:, off:off + K_CHUNK], one_hot_t,
                                preferred_element_type=jnp.float32)

    # Single tile-aligned 32-bit transpose back to row-major [ROWS, E].
    y = jnp.transpose(acc_t, (1, 0))                    # [ROWS, E] f32
    y = y + p_ref[0:1, :]                               # + linear bias

    # LayerNorm over features (MaskedNorm 'layer', eval path), all f32.
    # Variance as E[y^2] - mu^2: the two lane reductions are independent.
    n_inv = 1.0 / e_dim
    s1 = jnp.sum(y, axis=-1, keepdims=True)
    s2 = jnp.sum(y * y, axis=-1, keepdims=True)
    mu = s1 * n_inv
    var = s2 * n_inv - mu * mu
    y = (y - mu) * jax.lax.rsqrt(var + EPS)
    y = y * p_ref[1:2, :] + p_ref[2:3, :]               # gamma*SCALE, beta*SCALE

    # ReLU (sqrt(E) scale already folded into the affine above).
    o_ref[...] = jnp.maximum(y, 0.0).astype(o_ref.dtype)


# ----------------------------- param preparation -----------------------------
def prepare_params(raw):
    """Fold Linear into the table, transpose it, fold sqrt(E) into the affine."""
    fused = (raw["table"] @ raw["w_t"]).astype(jnp.bfloat16)       # [V, E] bf16
    fused_t = fused.T                                              # [E, V] bf16
    packed = jnp.zeros((8, E_DIM), jnp.float32)
    packed = packed.at[0].set(raw["b"])
    packed = packed.at[1].set(raw["gamma"] * SCALE)
    packed = packed.at[2].set(raw["beta"] * SCALE)
    return {"fused": fused, "fused_t": fused_t, "packed": packed}


# ----------------------------- wrapper ---------------------------------------
def text_embeddings_forward(token_ids, mask, params):
    """token_ids: int32 [B, L]; mask unused (eval-mode MaskedNorm ignores it)."""
    del mask  # eval-mode MaskedNorm does not use the mask
    B, L = token_ids.shape
    rows = B * L
    assert rows % ROWS_PER_BLOCK == 0
    n_blocks = rows // ROWS_PER_BLOCK

    # Enforce ids in [0, V) (matches jnp.take's clip; guards the one-hot path).
    ids = jnp.clip(token_ids.astype(jnp.int32), 0, VOCAB - 1)
    ids_lane = ids.reshape(n_blocks, ROWS_PER_BLOCK)    # lane-dense ids layout

    fused_t = params["fused_t"]    # [E, V] bf16, VMEM-resident
    packed = params["packed"]      # [8, E] f32, VMEM-resident

    flops = 2 * rows * VOCAB * E_DIM
    bytes_accessed = (E_DIM * VOCAB * 2        # fused^T table (bf16)
                      + rows * 4               # ids (lane-dense)
                      + 8 * E_DIM * 4          # packed affine params
                      + rows * E_DIM * 4)      # output (f32)

    out = pl.pallas_call(
        text_embed_kernel,
        out_shape=jax.ShapeDtypeStruct((rows, E_DIM), jnp.float32),
        grid=(n_blocks,),
        in_specs=[
            pl.BlockSpec((1, ROWS_PER_BLOCK), lambda i: (i, 0)),   # lane-dense ids
            pl.BlockSpec((E_DIM, VOCAB), lambda i: (0, 0)),        # VMEM-resident
            pl.BlockSpec((8, E_DIM), lambda i: (0, 0)),            # VMEM-resident
        ],
        out_specs=pl.BlockSpec((ROWS_PER_BLOCK, E_DIM), lambda i: (i, 0)),
        compiler_params=pltpu.CompilerParams(
            dimension_semantics=("parallel",)),
        cost_estimate=pl.CostEstimate(flops=flops, transcendentals=rows,
                                      bytes_accessed=bytes_accessed),
    )(ids_lane, fused_t, packed)

    # MaskedNorm reshapes to [x.shape[0], -1, num_features] -> per-seq [L, 1, E]
    return out.reshape(B, L, 1, E_DIM)


# ----------------------------- pure-JAX reference ----------------------------
def reference_forward(token_ids, raw, fused_bf16):
    """Original module math order (un-folded), using the same bf16 fused table."""
    B, L = token_ids.shape
    ids = jnp.clip(token_ids.astype(jnp.int32), 0, VOCAB - 1).reshape(-1)
    emb = jnp.take(fused_bf16, ids, axis=0).astype(jnp.float32)     # [B*L, E]
    y = emb + raw["b"]
    mu = jnp.mean(y, axis=-1, keepdims=True)
    var = jnp.mean((y - mu) ** 2, axis=-1, keepdims=True)
    y = (y - mu) / jnp.sqrt(var + EPS)
    y = y * raw["gamma"] + raw["beta"]
    y = jnp.maximum(y, 0.0)
    return (y * SCALE).reshape(B, L, 1, E_DIM)


# ----------------------------- main ------------------------------------------
if __name__ == "__main__":
    key = jax.random.PRNGKey(0)
    k_tab, k_w, k_b, k_g, k_beta, k_ids = jax.random.split(key, 6)

    raw = {
        "table": jax.random.normal(k_tab, (VOCAB, D_IN), jnp.float32) * 0.02,
        "w_t": jax.random.normal(k_w, (D_IN, E_DIM), jnp.float32)
        * (1.0 / math.sqrt(D_IN)),
        "b": jax.random.normal(k_b, (E_DIM,), jnp.float32) * 0.01,
        "gamma": jnp.ones((E_DIM,), jnp.float32)
        + 0.05 * jax.random.normal(k_g, (E_DIM,), jnp.float32),
        "beta": 0.05 * jax.random.normal(k_beta, (E_DIM,), jnp.float32),
    }
    params = prepare_params(raw)

    # "Pre-tokenized" ids, padded to max_length (tokenization is string-side glue).
    token_ids = jax.random.randint(k_ids, (BATCH, MAX_LENGTH), 0, VOCAB, jnp.int32)
    mask = jnp.ones((BATCH, MAX_LENGTH), jnp.float32)  # frame mask (unused in eval)

    out = text_embeddings_forward(token_ids, mask, params)
    out = jax.block_until_ready(out)

    ref = reference_forward(token_ids, raw, params["fused"])
    np.testing.assert_allclose(np.asarray(out), np.asarray(ref),
                               rtol=5e-4, atol=2e-3)
    assert out.shape == (BATCH, MAX_LENGTH, 1, E_DIM)

    print("KERNEL_OK")
</pallas_src>

<mosaic_0001>
module attributes {stable_mosaic.version = 11 : i64} {
  func.func @text_embed_kernel(%arg0: i32, %arg1: memref<1x256xi32, #tpu.memory_space<vmem>>, %arg2: memref<128x512xbf16, #tpu.memory_space<vmem>>, %arg3: memref<8x128xf32, #tpu.memory_space<vmem>>, %arg4: memref<256x128xf32, #tpu.memory_space<vmem>>) attributes {dimension_semantics = [#tpu.dimension_semantics<parallel>], iteration_bounds = array<i64: 1>, scalar_prefetch = 0 : i64, scratch_operands = 0 : i64, tpu.core_type = #tpu.core_type<tc>, window_params = [{transform_indices = @transform_0, window_bounds = array<i64: 1, 256>}, {pipeline_mode = #tpu.pipeline_mode<synchronous>, transform_indices = @transform_1, window_bounds = array<i64: 128, 512>}, {pipeline_mode = #tpu.pipeline_mode<synchronous>, transform_indices = @transform_2, window_bounds = array<i64: 8, 128>}, {transform_indices = @transform_3, window_bounds = array<i64: 256, 128>}]} {
    %c0 = arith.constant 0 : index
    %c0_0 = arith.constant 0 : index
    %0 = vector.load %arg1[%c0, %c0_0] : memref<1x256xi32, #tpu.memory_space<vmem>>, vector<1x256xi32>
    %cst = arith.constant 0.000000e+00 : f32
    %1 = vector.broadcast %cst : f32 to vector<128x256xf32>
    %2 = tpu.iota {dimensions = array<i32: 0>} : vector<128x256xi32>
    %c0_i32 = arith.constant 0 : i32
    %3 = vector.broadcast %c0_i32 : i32 to vector<128x256xi32>
    %4 = arith.addi %2, %3 : vector<128x256xi32>
    %5 = vector.broadcast %0 : vector<1x256xi32> to vector<128x256xi32>
    %6 = arith.cmpi eq, %4, %5 : vector<128x256xi32>
    %7 = arith.extui %6 : vector<128x256xi1> to vector<128x256xi32>
    %8 = arith.sitofp %7 : vector<128x256xi32> to vector<128x256xf32>
    %9 = arith.truncf %8 : vector<128x256xf32> to vector<128x256xbf16>
    %c0_1 = arith.constant 0 : index
    %c0_2 = arith.constant 0 : index
    %10 = vector.load %arg2[%c0_1, %c0_2] : memref<128x512xbf16, #tpu.memory_space<vmem>>, vector<128x128xbf16>
    %cst_3 = arith.constant dense<0.000000e+00> : vector<128x256xf32>
    %11 = tpu.matmul %10, %9, %cst_3 {dimension_numbers = #tpu.dot_dimension_numbers<[1], [0], [0], [1], [0, 0, 1, 1], [], []>} : vector<128x128xbf16>, vector<128x256xbf16>, vector<128x256xf32> -> vector<128x256xf32>
    %12 = arith.addf %1, %11 : vector<128x256xf32>
    %13 = tpu.iota {dimensions = array<i32: 0>} : vector<128x256xi32>
    %c128_i32 = arith.constant 128 : i32
    %14 = vector.broadcast %c128_i32 : i32 to vector<128x256xi32>
    %15 = arith.addi %13, %14 : vector<128x256xi32>
    %16 = vector.broadcast %0 : vector<1x256xi32> to vector<128x256xi32>
    %17 = arith.cmpi eq, %15, %16 : vector<128x256xi32>
    %18 = arith.extui %17 : vector<128x256xi1> to vector<128x256xi32>
    %19 = arith.sitofp %18 : vector<128x256xi32> to vector<128x256xf32>
    %20 = arith.truncf %19 : vector<128x256xf32> to vector<128x256xbf16>
    %c0_4 = arith.constant 0 : index
    %c128 = arith.constant 128 : index
    %21 = vector.load %arg2[%c0_4, %c128] : memref<128x512xbf16, #tpu.memory_space<vmem>>, vector<128x128xbf16>
    %cst_5 = arith.constant dense<0.000000e+00> : vector<128x256xf32>
    %22 = tpu.matmul %21, %20, %cst_5 {dimension_numbers = #tpu.dot_dimension_numbers<[1], [0], [0], [1], [0, 0, 1, 1], [], []>} : vector<128x128xbf16>, vector<128x256xbf16>, vector<128x256xf32> -> vector<128x256xf32>
    %23 = arith.addf %12, %22 : vector<128x256xf32>
    %24 = tpu.iota {dimensions = array<i32: 0>} : vector<128x256xi32>
    %c256_i32 = arith.constant 256 : i32
    %25 = vector.broadcast %c256_i32 : i32 to vector<128x256xi32>
    %26 = arith.addi %24, %25 : vector<128x256xi32>
    %27 = vector.broadcast %0 : vector<1x256xi32> to vector<128x256xi32>
    %28 = arith.cmpi eq, %26, %27 : vector<128x256xi32>
    %29 = arith.extui %28 : vector<128x256xi1> to vector<128x256xi32>
    %30 = arith.sitofp %29 : vector<128x256xi32> to vector<128x256xf32>
    %31 = arith.truncf %30 : vector<128x256xf32> to vector<128x256xbf16>
    %c0_6 = arith.constant 0 : index
    %c256 = arith.constant 256 : index
    %32 = vector.load %arg2[%c0_6, %c256] : memref<128x512xbf16, #tpu.memory_space<vmem>>, vector<128x128xbf16>
    %cst_7 = arith.constant dense<0.000000e+00> : vector<128x256xf32>
    %33 = tpu.matmul %32, %31, %cst_7 {dimension_numbers = #tpu.dot_dimension_numbers<[1], [0], [0], [1], [0, 0, 1, 1], [], []>} : vector<128x128xbf16>, vector<128x256xbf16>, vector<128x256xf32> -> vector<128x256xf32>
    %34 = arith.addf %23, %33 : vector<128x256xf32>
    %35 = tpu.iota {dimensions = array<i32: 0>} : vector<128x256xi32>
    %c384_i32 = arith.constant 384 : i32
    %36 = vector.broadcast %c384_i32 : i32 to vector<128x256xi32>
    %37 = arith.addi %35, %36 : vector<128x256xi32>
    %38 = vector.broadcast %0 : vector<1x256xi32> to vector<128x256xi32>
    %39 = arith.cmpi eq, %37, %38 : vector<128x256xi32>
    %40 = arith.extui %39 : vector<128x256xi1> to vector<128x256xi32>
    %41 = arith.sitofp %40 : vector<128x256xi32> to vector<128x256xf32>
    %42 = arith.truncf %41 : vector<128x256xf32> to vector<128x256xbf16>
    %c0_8 = arith.constant 0 : index
    %c384 = arith.constant 384 : index
    %43 = vector.load %arg2[%c0_8, %c384] : memref<128x512xbf16, #tpu.memory_space<vmem>>, vector<128x128xbf16>
    %cst_9 = arith.constant dense<0.000000e+00> : vector<128x256xf32>
    %44 = tpu.matmul %43, %42, %cst_9 {dimension_numbers = #tpu.dot_dimension_numbers<[1], [0], [0], [1], [0, 0, 1, 1], [], []>} : vector<128x128xbf16>, vector<128x256xbf16>, vector<128x256xf32> -> vector<128x256xf32>
    %45 = arith.addf %34, %44 : vector<128x256xf32>
    %46 = tpu.transpose %45, [1, 0] : vector<128x256xf32> -> vector<256x128xf32>
    %c0_10 = arith.constant 0 : index
    %c0_11 = arith.constant 0 : index
    %47 = vector.load %arg3[%c0_10, %c0_11] : memref<8x128xf32, #tpu.memory_space<vmem>>, vector<1x128xf32>
    %48 = vector.broadcast %47 : vector<1x128xf32> to vector<256x128xf32>
    %49 = arith.addf %46, %48 : vector<256x128xf32>
    %cst_12 = arith.constant dense<0.000000e+00> : vector<256xf32>
    %50 = vector.multi_reduction <add>, %49, %cst_12 [1] : vector<256x128xf32> to vector<256xf32>
    %51 = vector.shape_cast %50 : vector<256xf32> to vector<256x1xf32>
    %52 = arith.mulf %49, %49 : vector<256x128xf32>
    %cst_13 = arith.constant dense<0.000000e+00> : vector<256xf32>
    %53 = vector.multi_reduction <add>, %52, %cst_13 [1] : vector<256x128xf32> to vector<256xf32>
    %54 = vector.shape_cast %53 : vector<256xf32> to vector<256x1xf32>
    %cst_14 = arith.constant 7.812500e-03 : f32
    %55 = vector.broadcast %cst_14 : f32 to vector<256x1xf32>
    %56 = arith.mulf %51, %55 : vector<256x1xf32>
    %cst_15 = arith.constant 7.812500e-03 : f32
    %57 = vector.broadcast %cst_15 : f32 to vector<256x1xf32>
    %58 = arith.mulf %54, %57 : vector<256x1xf32>
    %59 = arith.mulf %56, %56 : vector<256x1xf32>
    %60 = arith.subf %58, %59 : vector<256x1xf32>
    %61 = vector.broadcast %56 : vector<256x1xf32> to vector<256x128xf32>
    %62 = arith.subf %49, %61 : vector<256x128xf32>
    %cst_16 = arith.constant 9.99999974E-6 : f32
    %63 = vector.broadcast %cst_16 : f32 to vector<256x1xf32>
    %64 = arith.addf %60, %63 : vector<256x1xf32>
    %65 = math.rsqrt %64 : vector<256x1xf32>
    %66 = vector.broadcast %65 : vector<256x1xf32> to vector<256x128xf32>
    %67 = arith.mulf %62, %66 : vector<256x128xf32>
    %c1 = arith.constant 1 : index
    %c0_17 = arith.constant 0 : index
    %68 = vector.load %arg3[%c1, %c0_17] : memref<8x128xf32, #tpu.memory_space<vmem>>, vector<1x128xf32>
    %69 = vector.broadcast %68 : vector<1x128xf32> to vector<256x128xf32>
    %70 = arith.mulf %67, %69 : vector<256x128xf32>
    %c2 = arith.constant 2 : index
    %c0_18 = arith.constant 0 : index
    %71 = vector.load %arg3[%c2, %c0_18] : memref<8x128xf32, #tpu.memory_space<vmem>>, vector<1x128xf32>
    %72 = vector.broadcast %71 : vector<1x128xf32> to vector<256x128xf32>
    %73 = arith.addf %70, %72 : vector<256x128xf32>
    %cst_19 = arith.constant 0.000000e+00 : f32
    %74 = vector.broadcast %cst_19 : f32 to vector<256x128xf32>
    %75 = arith.maximumf %73, %74 : vector<256x128xf32>
    %c0_20 = arith.constant 0 : index
    %c0_21 = arith.constant 0 : index
    %76 = vector.load %arg4[%c0_20, %c0_21] : memref<256x128xf32, #tpu.memory_space<vmem>>, vector<256x128xf32>
    tpu.vector_store %arg4[%c0_20, %c0_21], %75 {strides = array<i32>} : memref<256x128xf32, #tpu.memory_space<vmem>>, vector<256x128xf32>,
    return
  }
  func.func @transform_0(%arg0: i32) -> (i32, i32) {
    %c0_i32 = arith.constant 0 : i32
    %c0_i32_0 = arith.constant 0 : i32
    return %arg0, %c0_i32 : i32, i32
  }
  func.func @transform_1(%arg0: i32) -> (i32, i32) {
    %c0_i32 = arith.constant 0 : i32
    %c0_i32_0 = arith.constant 0 : i32
    %c0_i32_1 = arith.constant 0 : i32
    return %c0_i32, %c0_i32_0 : i32, i32
  }
  func.func @transform_2(%arg0: i32) -> (i32, i32) {
    %c0_i32 = arith.constant 0 : i32
    %c0_i32_0 = arith.constant 0 : i32
    %c0_i32_1 = arith.constant 0 : i32
    return %c0_i32, %c0_i32_0 : i32, i32
  }
  func.func @transform_3(%arg0: i32) -> (i32, i32) {
    %c0_i32 = arith.constant 0 : i32
    %c0_i32_0 = arith.constant 0 : i32
    return %arg0, %c0_i32 : i32, i32
  }
}

</mosaic_0001>

<llo_original>
// kernel: tpu_custom_call.1
$region0: #{tpu_custom_call.1}
  #allocation0 [shape = 'u32[]', space=smem, size = 0x4, offset = 0x4, fixed_abs, tag = 'smem constant byte address 0x4 - core index']
  #allocation1 [shape = 'u32[144,128]{1,0:T(1,128)}', space=vmem, size = 0x12000, scoped, tag = 'internal scratch']
  %s0 = inlined_call_operand.hbm [shape: s32[1,256], index: 0, kind: input, shape index: {}]
  %s1 = inlined_call_operand.hbm [shape: bf16[128,512], index: 1, kind: input, shape index: {}]
  %s2 = inlined_call_operand.hbm [shape: f32[8,128], index: 2, kind: input, shape index: {}]
  %s3 = inlined_call_operand.hbm [shape: f32[256,128], index: 3, kind: output, shape index: {}]
  %s4 = sld [smem:[#allocation0]]
  $region34: #{tpu_custom_call.1} parent=0
    _
  %s6 = ssub.s32 1, %s4
  %s7 = scalar_select 0, %s6, %s4
  $region1: #{tpu_custom_call.1} parent=0
    #allocation2 [shape = 'u8[1024]{0}', space=vmem, size = 0x400, scoped, tag = 'input window, operand 0, single buffered']
    #allocation3 [shape = 's32[1]{0}', space=sflag, size = 0x4, scoped, tag = 'scoped memory for tpu_custom_call.1']
    #allocation4 [shape = 's32[1]{0}', space=sflag, size = 0x4, scoped, tag = 'scoped memory for tpu_custom_call.1']
    #allocation5 [shape = 'u8[131072]{0}', space=vmem, size = 0x20000, scoped, tag = 'input window, operand 1, single buffered']
    #allocation6 [shape = 's32[1]{0}', space=sflag, size = 0x4, scoped, tag = 'scoped memory for tpu_custom_call.1']
    #allocation7 [shape = 'u8[4096]{0}', space=vmem, size = 0x1000, scoped, tag = 'input window, operand 2, single buffered']
    #allocation8 [shape = 'u8[131072]{0}', space=vmem, size = 0x20000, scoped, tag = 'output window, operand 0, single buffered']
    %8 = vsyncpa [#allocation3], 0
    %9 = vsyncpa [#allocation6], 0
    %10 = vsyncpa [#allocation4], 0
    // Predicated region
    $region2: #{tpu_custom_call.1} parent=1 // pred_check
      _
    $region3: #{tpu_custom_call.1} parent=1 // pred_check_branch
      %12 = sbr.rel (0) target = $region5
    $region4: #{tpu_custom_call.1} parent=1 // pred_region
      %s14 = ssub.s32 32, 32
      %15 = vsyncadd [#allocation3], %s14
      %s17 = sshll.u32 [#allocation2], 4
      %s18 = int_to_ptr.vmem [resolvable:$true] %s17
      %20 = dma.hbm_to_vmem [thread:$0]  %s0, 32, %s18, [#allocation3]
    $region5: #{tpu_custom_call.1} parent=1 // pred_fallthru
      _
    // Predicated region
    $region6: #{tpu_custom_call.1} parent=1 // pred_check
      _
    $region7: #{tpu_custom_call.1} parent=1 // pred_check_branch
      %22 = sbr.rel (0) target = $region9
    $region8: #{tpu_custom_call.1} parent=1 // pred_region
      %s24 = ssub.s32 4096, 4096
      %25 = vsyncadd [#allocation6], %s24
      %s26 = sshll.u32 [#allocation5], 4
      %s27 = int_to_ptr.vmem [resolvable:$true] %s26
      %32 = dma.hbm_to_vmem [thread:$0]  %s1, 4096, %s27, [#allocation6], 256, 256, 16
    $region9: #{tpu_custom_call.1} parent=1 // pred_fallthru
      _
    // Predicated region
    $region10: #{tpu_custom_call.1} parent=1 // pred_check
      _
    $region11: #{tpu_custom_call.1} parent=1 // pred_check_branch
      %34 = sbr.rel (0) target = $region13
    $region12: #{tpu_custom_call.1} parent=1 // pred_region
      %s36 = ssub.s32 128, 128
      %37 = vsyncadd [#allocation6], %s36
      %s39 = sshll.u32 [#allocation7], 4
      %s40 = int_to_ptr.vmem [resolvable:$true] %s39
      %42 = dma.hbm_to_vmem [thread:$0]  %s2, 128, %s40, [#allocation6]
    $region13: #{tpu_custom_call.1} parent=1 // pred_fallthru
      _
    // Predicated region
    $region14: #{tpu_custom_call.1} parent=1 // pred_check
      _
    $region15: #{tpu_custom_call.1} parent=1 // pred_check_branch
      %44 = sbr.rel (0) target = $region17
    $region16: #{tpu_custom_call.1} parent=1 // pred_region
      %45 = dma.done [#allocation3], 32
    $region17: #{tpu_custom_call.1} parent=1 // pred_fallthru
      _
    // Predicated region
    $region18: #{tpu_custom_call.1} parent=1 // pred_check
      _
    $region19: #{tpu_custom_call.1} parent=1 // pred_check_branch
      %47 = sbr.rel (0) target = $region21
    $region20: #{tpu_custom_call.1} parent=1 // pred_region
      %48 = dma.done [#allocation6], 4096
    $region21: #{tpu_custom_call.1} parent=1 // pred_fallthru
      _
    // Predicated region
    $region22: #{tpu_custom_call.1} parent=1 // pred_check
      _
    $region23: #{tpu_custom_call.1} parent=1 // pred_check_branch
      %50 = sbr.rel (0) target = $region25
    $region24: #{tpu_custom_call.1} parent=1 // pred_region
      %51 = dma.done [#allocation6], 128
    $region25: #{tpu_custom_call.1} parent=1 // pred_fallthru
      _
    %v53 = vld [vmem:[#allocation2] sm:$0x3]
    %v54 = vlaneseq
    %v55 = vshrl.u32 %v54, 7
    %v56 = vadd.s32 %v55, 8
    %v57 = vadd.s32 %v55, 16
    %v58 = vadd.s32 %v55, 24
    %v59 = vadd.s32 %v55, 32
    %v60 = vadd.s32 %v55, 40
    %v61 = vadd.s32 %v55, 48
    %v62 = vadd.s32 %v55, 56
    %v63 = vadd.s32 %v55, 64
    %v64 = vadd.s32 %v55, 72
    %v65 = vadd.s32 %v55, 80
    %v66 = vadd.s32 %v55, 88
    %v67 = vadd.s32 %v55, 96
    %v68 = vadd.s32 %v55, 104
    %v69 = vadd.s32 %v55, 112
    %v70 = vadd.s32 %v55, 120
    %v71 = vlaneseq
    %v72 = vshrl.u32 %v71, 7
    %v73 = vsub.s32 0, %v72
    %v74 = vrot.slane %v53, %v73
    %v75 = vlaneseq
    %v76 = vshrl.u32 %v75, 7
    %v77 = vsub.s32 1, %v76
    %v78 = vrot.slane %v53, %v77
    %vm79 = vcmp.eq.s32.totalorder %v55, %v74
    %vm80 = vcmp.eq.s32.totalorder %v55, %v78
    %vm81 = vcmp.eq.s32.totalorder %v56, %v74
    %vm82 = vcmp.eq.s32.totalorder %v56, %v78
    %vm83 = vcmp.eq.s32.totalorder %v57, %v74
    %vm84 = vcmp.eq.s32.totalorder %v57, %v78
    %vm85 = vcmp.eq.s32.totalorder %v58, %v74
    %vm86 = vcmp.eq.s32.totalorder %v58, %v78
    %vm87 = vcmp.eq.s32.totalorder %v59, %v74
    %vm88 = vcmp.eq.s32.totalorder %v59, %v78
    %vm89 = vcmp.eq.s32.totalorder %v60, %v74
    %vm90 = vcmp.eq.s32.totalorder %v60, %v78
    %vm91 = vcmp.eq.s32.totalorder %v61, %v74
    %vm92 = vcmp.eq.s32.totalorder %v61, %v78
    %vm93 = vcmp.eq.s32.totalorder %v62, %v74
    %vm94 = vcmp.eq.s32.totalorder %v62, %v78
    %vm95 = vcmp.eq.s32.totalorder %v63, %v74
    %vm96 = vcmp.eq.s32.totalorder %v63, %v78
    %vm97 = vcmp.eq.s32.totalorder %v64, %v74
    %vm98 = vcmp.eq.s32.totalorder %v64, %v78
    %vm99 = vcmp.eq.s32.totalorder %v65, %v74
    %vm100 = vcmp.eq.s32.totalorder %v65, %v78
    %vm101 = vcmp.eq.s32.totalorder %v66, %v74
    %vm102 = vcmp.eq.s32.totalorder %v66, %v78
    %vm103 = vcmp.eq.s32.totalorder %v67, %v74
    %vm104 = vcmp.eq.s32.totalorder %v67, %v78
    %vm105 = vcmp.eq.s32.totalorder %v68, %v74
    %vm106 = vcmp.eq.s32.totalorder %v68, %v78
    %vm107 = vcmp.eq.s32.totalorder %v69, %v74
    %vm108 = vcmp.eq.s32.totalorder %v69, %v78
    %vm109 = vcmp.eq.s32.totalorder %v70, %v74
    %vm110 = vcmp.eq.s32.totalorder %v70, %v78
    %v111 = vsel %vm79, 1, 0
    %v112 = vsel %vm80, 1, 0
    %v113 = vsel %vm81, 1, 0
    %v114 = vsel %vm82, 1, 0
    %v115 = vsel %vm83, 1, 0
    %v116 = vsel %vm84, 1, 0
    %v117 = vsel %vm85, 1, 0
    %v118 = vsel %vm86, 1, 0
    %v119 = vsel %vm87, 1, 0
    %v120 = vsel %vm88, 1, 0
    %v121 = vsel %vm89, 1, 0
    %v122 = vsel %vm90, 1, 0
    %v123 = vsel %vm91, 1, 0
    %v124 = vsel %vm92, 1, 0
    %v125 = vsel %vm93, 1, 0
    %v126 = vsel %vm94, 1, 0
    %v127 = vsel %vm95, 1, 0
    %v128 = vsel %vm96, 1, 0
    %v129 = vsel %vm97, 1, 0
    %v130 = vsel %vm98, 1, 0
    %v131 = vsel %vm99, 1, 0
    %v132 = vsel %vm100, 1, 0
    %v133 = vsel %vm101, 1, 0
    %v134 = vsel %vm102, 1, 0
    %v135 = vsel %vm103, 1, 0
    %v136 = vsel %vm104, 1, 0
    %v137 = vsel %vm105, 1, 0
    %v138 = vsel %vm106, 1, 0
    %v139 = vsel %vm107, 1, 0
    %v140 = vsel %vm108, 1, 0
    %v141 = vsel %vm109, 1, 0
    %v142 = vsel %vm110, 1, 0
    %v143 = vcvt.s32.f32 %v111
    %v144 = vcvt.s32.f32 %v112
    %v145 = vcvt.s32.f32 %v113
    %v146 = vcvt.s32.f32 %v114
    %v147 = vcvt.s32.f32 %v115
    %v148 = vcvt.s32.f32 %v116
    %v149 = vcvt.s32.f32 %v117
    %v150 = vcvt.s32.f32 %v118
    %v151 = vcvt.s32.f32 %v119
    %v152 = vcvt.s32.f32 %v120
    %v153 = vcvt.s32.f32 %v121
    %v154 = vcvt.s32.f32 %v122
    %v155 = vcvt.s32.f32 %v123
    %v156 = vcvt.s32.f32 %v124
    %v157 = vcvt.s32.f32 %v125
    %v158 = vcvt.s32.f32 %v126
    %v159 = vcvt.s32.f32 %v127
    %v160 = vcvt.s32.f32 %v128
    %v161 = vcvt.s32.f32 %v129
    %v162 = vcvt.s32.f32 %v130
    %v163 = vcvt.s32.f32 %v131
    %v164 = vcvt.s32.f32 %v132
    %v165 = vcvt.s32.f32 %v133
    %v166 = vcvt.s32.f32 %v134
    %v167 = vcvt.s32.f32 %v135
    %v168 = vcvt.s32.f32 %v136
    %v169 = vcvt.s32.f32 %v137
    %v170 = vcvt.s32.f32 %v138
    %v171 = vcvt.s32.f32 %v139
    %v172 = vcvt.s32.f32 %v140
    %v173 = vcvt.s32.f32 %v141
    %v174 = vcvt.s32.f32 %v142
    %v175 = vpack.c.bf16 %v145, %v143
    %v176 = vpack.c.bf16 %v146, %v144
    %v177 = vpack.c.bf16 %v149, %v147
    %v178 = vpack.c.bf16 %v150, %v148
    %v179 = vpack.c.bf16 %v153, %v151
    %v180 = vpack.c.bf16 %v154, %v152
    %v181 = vpack.c.bf16 %v157, %v155
    %v182 = vpack.c.bf16 %v158, %v156
    %v183 = vpack.c.bf16 %v161, %v159
    %v184 = vpack.c.bf16 %v162, %v160
    %v185 = vpack.c.bf16 %v165, %v163
    %v186 = vpack.c.bf16 %v166, %v164
    %v187 = vpack.c.bf16 %v169, %v167
    %v188 = vpack.c.bf16 %v170, %v168
    %v189 = vpack.c.bf16 %v173, %v171
    %v190 = vpack.c.bf16 %v174, %v172
    %v191 = vld [vmem:[#allocation5] sm:$0xf]
    %v192 = vld [vmem:[#allocation5 + $0x10] sm:$0xf]
    %v193 = vld [vmem:[#allocation5 + $0x20] sm:$0xf]
    %v194 = vld [vmem:[#allocation5 + $0x30] sm:$0xf]
    %v195 = vld [vmem:[#allocation5 + $0x40] sm:$0xf]
    %v196 = vld [vmem:[#allocation5 + $0x50] sm:$0xf]
    %v197 = vld [vmem:[#allocation5 + $0x60] sm:$0xf]
    %v198 = vld [vmem:[#allocation5 + $0x70] sm:$0xf]
    %v199 = vld [vmem:[#allocation5 + $0x80] sm:$0xf]
    %v200 = vld [vmem:[#allocation5 + $0x90] sm:$0xf]
    %v201 = vld [vmem:[#allocation5 + $0xa0] sm:$0xf]
    %v202 = vld [vmem:[#allocation5 + $0xb0] sm:$0xf]
    %v203 = vld [vmem:[#allocation5 + $0xc0] sm:$0xf]
    %v204 = vld [vmem:[#allocation5 + $0xd0] sm:$0xf]
    %v205 = vld [vmem:[#allocation5 + $0xe0] sm:$0xf]
    %v206 = vld [vmem:[#allocation5 + $0xf0] sm:$0xf]
    %v207 = vadd.s32 %v55, 128
    %v208 = vadd.s32 %v56, 128
    %v209 = vadd.s32 %v57, 128
    %v210 = vadd.s32 %v58, 128
    %v211 = vadd.s32 %v59, 128
    %v212 = vadd.s32 %v60, 128
    %v213 = vadd.s32 %v61, 128
    %v214 = vadd.s32 %v62, 128
    %v215 = vadd.s32 %v63, 128
    %v216 = vadd.s32 %v64, 128
    %v217 = vadd.s32 %v65, 128
    %v218 = vadd.s32 %v66, 128
    %v219 = vadd.s32 %v67, 128
    %v220 = vadd.s32 %v68, 128
    %v221 = vadd.s32 %v69, 128
    %v222 = vadd.s32 %v70, 128
    %vm223 = vcmp.eq.s32.totalorder %v207, %v74
    %vm224 = vcmp.eq.s32.totalorder %v207, %v78
    %vm225 = vcmp.eq.s32.totalorder %v208, %v74
    %vm226 = vcmp.eq.s32.totalorder %v208, %v78
    %vm227 = vcmp.eq.s32.totalorder %v209, %v74
    %vm228 = vcmp.eq.s32.totalorder %v209, %v78
    %vm229 = vcmp.eq.s32.totalorder %v210, %v74
    %vm230 = vcmp.eq.s32.totalorder %v210, %v78
    %vm231 = vcmp.eq.s32.totalorder %v211, %v74
    %vm232 = vcmp.eq.s32.totalorder %v211, %v78
    %vm233 = vcmp.eq.s32.totalorder %v212, %v74
    %vm234 = vcmp.eq.s32.totalorder %v212, %v78
    %vm235 = vcmp.eq.s32.totalorder %v213, %v74
    %vm236 = vcmp.eq.s32.totalorder %v213, %v78
    %vm237 = vcmp.eq.s32.totalorder %v214, %v74
    %vm238 = vcmp.eq.s32.totalorder %v214, %v78
    %vm239 = vcmp.eq.s32.totalorder %v215, %v74
    %vm240 = vcmp.eq.s32.totalorder %v215, %v78
    %vm241 = vcmp.eq.s32.totalorder %v216, %v74
    %vm242 = vcmp.eq.s32.totalorder %v216, %v78
    %vm243 = vcmp.eq.s32.totalorder %v217, %v74
    %vm244 = vcmp.eq.s32.totalorder %v217, %v78
    %vm245 = vcmp.eq.s32.totalorder %v218, %v74
    %vm246 = vcmp.eq.s32.totalorder %v218, %v78
    %vm247 = vcmp.eq.s32.totalorder %v219, %v74
    %vm248 = vcmp.eq.s32.totalorder %v219, %v78
    %vm249 = vcmp.eq.s32.totalorder %v220, %v74
    %vm250 = vcmp.eq.s32.totalorder %v220, %v78
    %vm251 = vcmp.eq.s32.totalorder %v221, %v74
    %vm252 = vcmp.eq.s32.totalorder %v221, %v78
    %vm253 = vcmp.eq.s32.totalorder %v222, %v74
    %vm254 = vcmp.eq.s32.totalorder %v222, %v78
    %v255 = vsel %vm223, 1, 0
    %v256 = vsel %vm224, 1, 0
    %v257 = vsel %vm225, 1, 0
    %v258 = vsel %vm226, 1, 0
    %v259 = vsel %vm227, 1, 0
    %v260 = vsel %vm228, 1, 0
    %v261 = vsel %vm229, 1, 0
    %v262 = vsel %vm230, 1, 0
    %v263 = vsel %vm231, 1, 0
    %v264 = vsel %vm232, 1, 0
    %v265 = vsel %vm233, 1, 0
    %v266 = vsel %vm234, 1, 0
    %v267 = vsel %vm235, 1, 0
    %v268 = vsel %vm236, 1, 0
    %v269 = vsel %vm237, 1, 0
    %v270 = vsel %vm238, 1, 0
    %v271 = vsel %vm239, 1, 0
    %v272 = vsel %vm240, 1, 0
    %v273 = vsel %vm241, 1, 0
    %v274 = vsel %vm242, 1, 0
    %v275 = vsel %vm243, 1, 0
    %v276 = vsel %vm244, 1, 0
    %v277 = vsel %vm245, 1, 0
    %v278 = vsel %vm246, 1, 0
    %v279 = vsel %vm247, 1, 0
    %v280 = vsel %vm248, 1, 0
    %v281 = vsel %vm249, 1, 0
    %v282 = vsel %vm250, 1, 0
    %v283 = vsel %vm251, 1, 0
    %v284 = vsel %vm252, 1, 0
    %v285 = vsel %vm253, 1, 0
    %v286 = vsel %vm254, 1, 0
    %v287 = vcvt.s32.f32 %v255
    %v288 = vcvt.s32.f32 %v256
    %v289 = vcvt.s32.f32 %v257
    %v290 = vcvt.s32.f32 %v258
    %v291 = vcvt.s32.f32 %v259
    %v292 = vcvt.s32.f32 %v260
    %v293 = vcvt.s32.f32 %v261
    %v294 = vcvt.s32.f32 %v262
    %v295 = vcvt.s32.f32 %v263
    %v296 = vcvt.s32.f32 %v264
    %v297 = vcvt.s32.f32 %v265
    %v298 = vcvt.s32.f32 %v266
    %v299 = vcvt.s32.f32 %v267
    %v300 = vcvt.s32.f32 %v268
    %v301 = vcvt.s32.f32 %v269
    %v302 = vcvt.s32.f32 %v270
    %v303 = vcvt.s32.f32 %v271
    %v304 = vcvt.s32.f32 %v272
    %v305 = vcvt.s32.f32 %v273
    %v306 = vcvt.s32.f32 %v274
    %v307 = vcvt.s32.f32 %v275
    %v308 = vcvt.s32.f32 %v276
    %v309 = vcvt.s32.f32 %v277
    %v310 = vcvt.s32.f32 %v278
    %v311 = vcvt.s32.f32 %v279
    %v312 = vcvt.s32.f32 %v280
    %v313 = vcvt.s32.f32 %v281
    %v314 = vcvt.s32.f32 %v282
    %v315 = vcvt.s32.f32 %v283
    %v316 = vcvt.s32.f32 %v284
    %v317 = vcvt.s32.f32 %v285
    %v318 = vcvt.s32.f32 %v286
    %v319 = vpack.c.bf16 %v289, %v287
    %v320 = vpack.c.bf16 %v290, %v288
    %v321 = vpack.c.bf16 %v293, %v291
    %v322 = vpack.c.bf16 %v294, %v292
    %v323 = vpack.c.bf16 %v297, %v295
    %v324 = vpack.c.bf16 %v298, %v296
    %v325 = vpack.c.bf16 %v301, %v299
    %v326 = vpack.c.bf16 %v302, %v300
    %v327 = vpack.c.bf16 %v305, %v303
    %v328 = vpack.c.bf16 %v306, %v304
    %v329 = vpack.c.bf16 %v309, %v307
    %v330 = vpack.c.bf16 %v310, %v308
    %v331 = vpack.c.bf16 %v313, %v311
    %v332 = vpack.c.bf16 %v314, %v312
    %v333 = vpack.c.bf16 %v317, %v315
    %v334 = vpack.c.bf16 %v318, %v316
    %v335 = vld [vmem:[#allocation5 + $0x4] sm:$0xf]
    %v336 = vld [vmem:[#allocation5 + $0x14] sm:$0xf]
    %v337 = vld [vmem:[#allocation5 + $0x24] sm:$0xf]
    %v338 = vld [vmem:[#allocation5 + $0x34] sm:$0xf]
    %v339 = vld [vmem:[#allocation5 + $0x44] sm:$0xf]
    %v340 = vld [vmem:[#allocation5 + $0x54] sm:$0xf]
    %v341 = vld [vmem:[#allocation5 + $0x64] sm:$0xf]
    %v342 = vld [vmem:[#allocation5 + $0x74] sm:$0xf]
    %v343 = vld [vmem:[#allocation5 + $0x84] sm:$0xf]
    %v344 = vld [vmem:[#allocation5 + $0x94] sm:$0xf]
    %v345 = vld [vmem:[#allocation5 + $0xa4] sm:$0xf]
    %v346 = vld [vmem:[#allocation5 + $0xb4] sm:$0xf]
    %v347 = vld [vmem:[#allocation5 + $0xc4] sm:$0xf]
    %v348 = vld [vmem:[#allocation5 + $0xd4] sm:$0xf]
    %v349 = vld [vmem:[#allocation5 + $0xe4] sm:$0xf]
    %v350 = vld [vmem:[#allocation5 + $0xf4] sm:$0xf]
    %v367 = vunpack.c.l.b16 %v335
    %v368 = vunpack.c.l.b16 %v336
    %v369 = vunpack.c.l.b16 %v337
    %v370 = vunpack.c.l.b16 %v338
    %v371 = vunpack.c.l.b16 %v339
    %v372 = vunpack.c.l.b16 %v340
    %v373 = vunpack.c.l.b16 %v341
    %v374 = vunpack.c.l.b16 %v342
    %v375 = vunpack.c.l.b16 %v343
    %v376 = vunpack.c.l.b16 %v344
    %v377 = vunpack.c.l.b16 %v345
    %v378 = vunpack.c.l.b16 %v346
    %v379 = vunpack.c.l.b16 %v347
    %v380 = vunpack.c.l.b16 %v348
    %v381 = vunpack.c.l.b16 %v349
    %v382 = vunpack.c.l.b16 %v350
    %v383 = vpack.c.b16 %v368, %v367
    %v384 = vpack.c.b16 %v370, %v369
    %v385 = vpack.c.b16 %v372, %v371
    %v386 = vpack.c.b16 %v374, %v373
    %v387 = vpack.c.b16 %v376, %v375
    %v388 = vpack.c.b16 %v378, %v377
    %v389 = vpack.c.b16 %v380, %v379
    %v390 = vpack.c.b16 %v382, %v381
    %399 = vmatprep.subr.bf16.mxu0 %v320
    %400 = vmatpush1.bf16.msra.mxu0 %v319
    %401 = vmatprep.subr.bf16.mxu0 %v322
    %402 = vmatpush1.bf16.msra.mxu0 %v321
    %403 = vmatprep.subr.bf16.mxu0 %v324
    %404 = vmatpush1.bf16.msra.mxu0 %v323
    %405 = vmatprep.subr.bf16.mxu0 %v326
    %406 = vmatpush1.bf16.msra.mxu0 %v325
    %407 = vmatprep.subr.bf16.mxu0 %v328
    %408 = vmatpush1.bf16.msra.mxu0 %v327
    %409 = vmatprep.subr.bf16.mxu0 %v330
    %410 = vmatpush1.bf16.msra.mxu0 %v329
    %411 = vmatprep.subr.bf16.mxu0 %v332
    %412 = vmatpush1.bf16.msra.mxu0 %v331
    %413 = vmatprep.subr.bf16.mxu0 %v334
    %414 = vmatpush1.bf16.msra.mxu0 %v333
    %415 = vmatprep.subr.bf16.mxu0 0
    %416 = vmatpush1.bf16.msra.mxu0 0
    %417 = vmatprep.subr.bf16.mxu0 0
    %418 = vmatpush1.bf16.msra.mxu0 0
    %419 = vmatprep.subr.bf16.mxu0 0
    %420 = vmatpush1.bf16.msra.mxu0 0
    %421 = vmatprep.subr.bf16.mxu0 0
    %422 = vmatpush1.bf16.msra.mxu0 0
    %423 = vmatprep.subr.bf16.mxu0 0
    %424 = vmatpush1.bf16.msra.mxu0 0
    %425 = vmatprep.subr.bf16.mxu0 0
    %426 = vmatpush1.bf16.msra.mxu0 0
    %427 = vmatprep.subr.bf16.mxu0 0
    %428 = vmatpush1.bf16.msra.mxu0 0
    %429 = vmatprep.subr.bf16.mxu0 0
    %430 = vmatpush1.bf16.msra.mxu0 0
    %431 = vmatprep.mubr.bf16.mxu0 0
    %432 = vmatmul.mubr.bf16.gmra.mrb[0].mxu0 %v383
    %v433 = vpop.f32.mrb[0].mxu0
    %v434 = vadd.f32 0.0, %v433
    %v435 = vpop.f32.mrb[0].mxu0
    %v436 = vadd.f32 0.0, %v435
    %v437 = vpop.f32.mrb[0].mxu0
    %v438 = vadd.f32 0.0, %v437
    %v439 = vpop.f32.mrb[0].mxu0
    %v440 = vadd.f32 0.0, %v439
    %441 = vmatprep.mubr.bf16.mxu0 0
    %442 = vmatmul.mubr.bf16.gmra.mrb[0].mxu0 %v384
    %v443 = vpop.f32.mrb[0].mxu0
    %v444 = vadd.f32 0.0, %v443
    %v445 = vpop.f32.mrb[0].mxu0
    %v446 = vadd.f32 0.0, %v445
    %v447 = vpop.f32.mrb[0].mxu0
    %v448 = vadd.f32 0.0, %v447
    %v449 = vpop.f32.mrb[0].mxu0
    %v450 = vadd.f32 0.0, %v449
    %451 = vmatprep.mubr.bf16.mxu0 0
    %452 = vmatmul.mubr.bf16.gmra.mrb[0].mxu0 %v385
    %v453 = vpop.f32.mrb[0].mxu0
    %v454 = vadd.f32 0.0, %v453
    %v455 = vpop.f32.mrb[0].mxu0
    %v456 = vadd.f32 0.0, %v455
    %v457 = vpop.f32.mrb[0].mxu0
    %v458 = vadd.f32 0.0, %v457
    %v459 = vpop.f32.mrb[0].mxu0
    %v460 = vadd.f32 0.0, %v459
    %461 = vmatprep.mubr.bf16.mxu0 0
    %462 = vmatmul.mubr.bf16.gmra.mrb[0].mxu0 %v386
    %v463 = vpop.f32.mrb[0].mxu0
    %v464 = vadd.f32 0.0, %v463
    %v465 = vpop.f32.mrb[0].mxu0
    %v466 = vadd.f32 0.0, %v465
    %v467 = vpop.f32.mrb[0].mxu0
    %v468 = vadd.f32 0.0, %v467
    %v469 = vpop.f32.mrb[0].mxu0
    %v470 = vadd.f32 0.0, %v469
    %471 = vmatprep.mubr.bf16.mxu0 0
    %472 = vmatmul.mubr.bf16.gmra.mrb[0].mxu0 %v387
    %v473 = vpop.f32.mrb[0].mxu0
    %v474 = vadd.f32 0.0, %v473
    %v475 = vpop.f32.mrb[0].mxu0
    %v476 = vadd.f32 0.0, %v475
    %v477 = vpop.f32.mrb[0].mxu0
    %v478 = vadd.f32 0.0, %v477
    %v479 = vpop.f32.mrb[0].mxu0
    %v480 = vadd.f32 0.0, %v479
    %481 = vmatprep.mubr.bf16.mxu0 0
    %482 = vmatmul.mubr.bf16.gmra.mrb[0].mxu0 %v388
    %v483 = vpop.f32.mrb[0].mxu0
    %v484 = vadd.f32 0.0, %v483
    %v485 = vpop.f32.mrb[0].mxu0
    %v486 = vadd.f32 0.0, %v485
    %v487 = vpop.f32.mrb[0].mxu0
    %v488 = vadd.f32 0.0, %v487
    %v489 = vpop.f32.mrb[0].mxu0
    %v490 = vadd.f32 0.0, %v489
    %491 = vmatprep.mubr.bf16.mxu0 0
    %492 = vmatmul.mubr.bf16.gmra.mrb[0].mxu0 %v389
    %v493 = vpop.f32.mrb[0].mxu0
    %v494 = vadd.f32 0.0, %v493
    %v495 = vpop.f32.mrb[0].mxu0
    %v496 = vadd.f32 0.0, %v495
    %v497 = vpop.f32.mrb[0].mxu0
    %v498 = vadd.f32 0.0, %v497
    %v499 = vpop.f32.mrb[0].mxu0
    %v500 = vadd.f32 0.0, %v499
    %501 = vmatprep.mubr.bf16.mxu0 0
    %502 = vmatmul.mubr.bf16.gmra.mrb[0].mxu0 %v390
    %v503 = vpop.f32.mrb[0].mxu0
    %v504 = vadd.f32 0.0, %v503
    %v505 = vpop.f32.mrb[0].mxu0
    %v506 = vadd.f32 0.0, %v505
    %v507 = vpop.f32.mrb[0].mxu0
    %v508 = vadd.f32 0.0, %v507
    %v509 = vpop.f32.mrb[0].mxu0
    %v510 = vadd.f32 0.0, %v509
    %511 = vdwg.mxu0
    %v528 = vunpack.c.l.b16 %v191
    %v529 = vunpack.c.l.b16 %v192
    %v530 = vunpack.c.l.b16 %v193
    %v531 = vunpack.c.l.b16 %v194
    %v532 = vunpack.c.l.b16 %v195
    %v533 = vunpack.c.l.b16 %v196
    %v534 = vunpack.c.l.b16 %v197
    %v535 = vunpack.c.l.b16 %v198
    %v536 = vunpack.c.l.b16 %v199
    %v537 = vunpack.c.l.b16 %v200
    %v538 = vunpack.c.l.b16 %v201
    %v539 = vunpack.c.l.b16 %v202
    %v540 = vunpack.c.l.b16 %v203
    %v541 = vunpack.c.l.b16 %v204
    %v542 = vunpack.c.l.b16 %v205
    %v543 = vunpack.c.l.b16 %v206
    %v544 = vpack.c.b16 %v529, %v528
    %v545 = vpack.c.b16 %v531, %v530
    %v546 = vpack.c.b16 %v533, %v532
    %v547 = vpack.c.b16 %v535, %v534
    %v548 = vpack.c.b16 %v537, %v536
    %v549 = vpack.c.b16 %v539, %v538
    %v550 = vpack.c.b16 %v541, %v540
    %v551 = vpack.c.b16 %v543, %v542
    %560 = vmatprep.subr.bf16.mxu0 %v176
    %561 = vmatpush1.bf16.msra.mxu0 %v175
    %562 = vmatprep.subr.bf16.mxu0 %v178
    %563 = vmatpush1.bf16.msra.mxu0 %v177
    %564 = vmatprep.subr.bf16.mxu0 %v180
    %565 = vmatpush1.bf16.msra.mxu0 %v179
    %566 = vmatprep.subr.bf16.mxu0 %v182
    %567 = vmatpush1.bf16.msra.mxu0 %v181
    %568 = vmatprep.subr.bf16.mxu0 %v184
    %569 = vmatpush1.bf16.msra.mxu0 %v183
    %570 = vmatprep.subr.bf16.mxu0 %v186
    %571 = vmatpush1.bf16.msra.mxu0 %v185
    %572 = vmatprep.subr.bf16.mxu0 %v188
    %573 = vmatpush1.bf16.msra.mxu0 %v187
    %574 = vmatprep.subr.bf16.mxu0 %v190
    %575 = vmatpush1.bf16.msra.mxu0 %v189
    %576 = vmatprep.subr.bf16.mxu0 0
    %577 = vmatpush1.bf16.msra.mxu0 0
    %578 = vmatprep.subr.bf16.mxu0 0
    %579 = vmatpush1.bf16.msra.mxu0 0
    %580 = vmatprep.subr.bf16.mxu0 0
    %581 = vmatpush1.bf16.msra.mxu0 0
    %582 = vmatprep.subr.bf16.mxu0 0
    %583 = vmatpush1.bf16.msra.mxu0 0
    %584 = vmatprep.subr.bf16.mxu0 0
    %585 = vmatpush1.bf16.msra.mxu0 0
    %586 = vmatprep.subr.bf16.mxu0 0
    %587 = vmatpush1.bf16.msra.mxu0 0
    %588 = vmatprep.subr.bf16.mxu0 0
    %589 = vmatpush1.bf16.msra.mxu0 0
    %590 = vmatprep.subr.bf16.mxu0 0
    %591 = vmatpush1.bf16.msra.mxu0 0
    %592 = vmatprep.mubr.bf16.mxu0 0
    %593 = vmatmul.mubr.bf16.gmra.mrb[0].mxu0 %v544
    %v594 = vpop.f32.mrb[0].mxu0
    %v595 = vadd.f32 %v434, %v594
    %v596 = vpop.f32.mrb[0].mxu0
    %v597 = vadd.f32 %v436, %v596
    %v598 = vpop.f32.mrb[0].mxu0
    %v599 = vadd.f32 %v438, %v598
    %v600 = vpop.f32.mrb[0].mxu0
    %v601 = vadd.f32 %v440, %v600
    %602 = vmatprep.mubr.bf16.mxu0 0
    %603 = vmatmul.mubr.bf16.gmra.mrb[0].mxu0 %v545
    %v604 = vpop.f32.mrb[0].mxu0
    %v605 = vadd.f32 %v444, %v604
    %v606 = vpop.f32.mrb[0].mxu0
    %v607 = vadd.f32 %v446, %v606
    %v608 = vpop.f32.mrb[0].mxu0
    %v609 = vadd.f32 %v448, %v608
    %v610 = vpop.f32.mrb[0].mxu0
    %v611 = vadd.f32 %v450, %v610
    %612 = vmatprep.mubr.bf16.mxu0 0
    %613 = vmatmul.mubr.bf16.gmra.mrb[0].mxu0 %v546
    %v614 = vpop.f32.mrb[0].mxu0
    %v615 = vadd.f32 %v454, %v614
    %v616 = vpop.f32.mrb[0].mxu0
    %v617 = vadd.f32 %v456, %v616
    %v618 = vpop.f32.mrb[0].mxu0
    %v619 = vadd.f32 %v458, %v618
    %v620 = vpop.f32.mrb[0].mxu0
    %v621 = vadd.f32 %v460, %v620
    %622 = vmatprep.mubr.bf16.mxu0 0
    %623 = vmatmul.mubr.bf16.gmra.mrb[0].mxu0 %v547
    %v624 = vpop.f32.mrb[0].mxu0
    %v625 = vadd.f32 %v464, %v624
    %v626 = vpop.f32.mrb[0].mxu0
    %v627 = vadd.f32 %v466, %v626
    %v628 = vpop.f32.mrb[0].mxu0
    %v629 = vadd.f32 %v468, %v628
    %v630 = vpop.f32.mrb[0].mxu0
    %v631 = vadd.f32 %v470, %v630
    %632 = vmatprep.mubr.bf16.mxu0 0
    %633 = vmatmul.mubr.bf16.gmra.mrb[0].mxu0 %v548
    %v634 = vpop.f32.mrb[0].mxu0
    %v635 = vadd.f32 %v474, %v634
    %v636 = vpop.f32.mrb[0].mxu0
    %v637 = vadd.f32 %v476, %v636
    %v638 = vpop.f32.mrb[0].mxu0
    %v639 = vadd.f32 %v478, %v638
    %v640 = vpop.f32.mrb[0].mxu0
    %v641 = vadd.f32 %v480, %v640
    %642 = vmatprep.mubr.bf16.mxu0 0
    %643 = vmatmul.mubr.bf16.gmra.mrb[0].mxu0 %v549
    %v644 = vpop.f32.mrb[0].mxu0
    %v645 = vadd.f32 %v484, %v644
    %v646 = vpop.f32.mrb[0].mxu0
    %v647 = vadd.f32 %v486, %v646
    %v648 = vpop.f32.mrb[0].mxu0
    %v649 = vadd.f32 %v488, %v648
    %v650 = vpop.f32.mrb[0].mxu0
    %v651 = vadd.f32 %v490, %v650
    %652 = vmatprep.mubr.bf16.mxu0 0
    %653 = vmatmul.mubr.bf16.gmra.mrb[0].mxu0 %v550
    %v654 = vpop.f32.mrb[0].mxu0
    %v655 = vadd.f32 %v494, %v654
    %v656 = vpop.f32.mrb[0].mxu0
    %v657 = vadd.f32 %v496, %v656
    %v658 = vpop.f32.mrb[0].mxu0
    %v659 = vadd.f32 %v498, %v658
    %v660 = vpop.f32.mrb[0].mxu0
    %v661 = vadd.f32 %v500, %v660
    %662 = vmatprep.mubr.bf16.mxu0 0
    %663 = vmatmul.mubr.bf16.gmra.mrb[0].mxu0 %v551
    %v664 = vpop.f32.mrb[0].mxu0
    %v665 = vadd.f32 %v504, %v664
    %v666 = vpop.f32.mrb[0].mxu0
    %v667 = vadd.f32 %v506, %v666
    %v668 = vpop.f32.mrb[0].mxu0
    %v669 = vadd.f32 %v508, %v668
    %v670 = vpop.f32.mrb[0].mxu0
    %v671 = vadd.f32 %v510, %v670
    %672 = vdwg.mxu0
    %v673 = vadd.s32 %v55, 256
    %v674 = vadd.s32 %v56, 256
    %v675 = vadd.s32 %v57, 256
    %v676 = vadd.s32 %v58, 256
    %v677 = vadd.s32 %v59, 256
    %v678 = vadd.s32 %v60, 256
    %v679 = vadd.s32 %v61, 256
    %v680 = vadd.s32 %v62, 256
    %v681 = vadd.s32 %v63, 256
    %v682 = vadd.s32 %v64, 256
    %v683 = vadd.s32 %v65, 256
    %v684 = vadd.s32 %v66, 256
    %v685 = vadd.s32 %v67, 256
    %v686 = vadd.s32 %v68, 256
    %v687 = vadd.s32 %v69, 256
    %v688 = vadd.s32 %v70, 256
    %vm689 = vcmp.eq.s32.totalorder %v673, %v74
    %vm690 = vcmp.eq.s32.totalorder %v673, %v78
    %vm691 = vcmp.eq.s32.totalorder %v674, %v74
    %vm692 = vcmp.eq.s32.totalorder %v674, %v78
    %vm693 = vcmp.eq.s32.totalorder %v675, %v74
    %vm694 = vcmp.eq.s32.totalorder %v675, %v78
    %vm695 = vcmp.eq.s32.totalorder %v676, %v74
    %vm696 = vcmp.eq.s32.totalorder %v676, %v78
    %vm697 = vcmp.eq.s32.totalorder %v677, %v74
    %vm698 = vcmp.eq.s32.totalorder %v677, %v78
    %vm699 = vcmp.eq.s32.totalorder %v678, %v74
    %vm700 = vcmp.eq.s32.totalorder %v678, %v78
    %vm701 = vcmp.eq.s32.totalorder %v679, %v74
    %vm702 = vcmp.eq.s32.totalorder %v679, %v78
    %vm703 = vcmp.eq.s32.totalorder %v680, %v74
    %vm704 = vcmp.eq.s32.totalorder %v680, %v78
    %vm705 = vcmp.eq.s32.totalorder %v681, %v74
    %vm706 = vcmp.eq.s32.totalorder %v681, %v78
    %vm707 = vcmp.eq.s32.totalorder %v682, %v74
    %vm708 = vcmp.eq.s32.totalorder %v682, %v78
    %vm709 = vcmp.eq.s32.totalorder %v683, %v74
    %vm710 = vcmp.eq.s32.totalorder %v683, %v78
    %vm711 = vcmp.eq.s32.totalorder %v684, %v74
    %vm712 = vcmp.eq.s32.totalorder %v684, %v78
    %vm713 = vcmp.eq.s32.totalorder %v685, %v74
    %vm714 = vcmp.eq.s32.totalorder %v685, %v78
    %vm715 = vcmp.eq.s32.totalorder %v686, %v74
    %vm716 = vcmp.eq.s32.totalorder %v686, %v78
    %vm717 = vcmp.eq.s32.totalorder %v687, %v74
    %vm718 = vcmp.eq.s32.totalorder %v687, %v78
    %vm719 = vcmp.eq.s32.totalorder %v688, %v74
    %vm720 = vcmp.eq.s32.totalorder %v688, %v78
    %v721 = vsel %vm689, 1, 0
    %v722 = vsel %vm690, 1, 0
    %v723 = vsel %vm691, 1, 0
    %v724 = vsel %vm692, 1, 0
    %v725 = vsel %vm693, 1, 0
    %v726 = vsel %vm694, 1, 0
    %v727 = vsel %vm695, 1, 0
    %v728 = vsel %vm696, 1, 0
    %v729 = vsel %vm697, 1, 0
    %v730 = vsel %vm698, 1, 0
    %v731 = vsel %vm699, 1, 0
    %v732 = vsel %vm700, 1, 0
    %v733 = vsel %vm701, 1, 0
    %v734 = vsel %vm702, 1, 0
    %v735 = vsel %vm703, 1, 0
    %v736 = vsel %vm704, 1, 0
    %v737 = vsel %vm705, 1, 0
    %v738 = vsel %vm706, 1, 0
    %v739 = vsel %vm707, 1, 0
    %v740 = vsel %vm708, 1, 0
    %v741 = vsel %vm709, 1, 0
    %v742 = vsel %vm710, 1, 0
    %v743 = vsel %vm711, 1, 0
    %v744 = vsel %vm712, 1, 0
    %v745 = vsel %vm713, 1, 0
    %v746 = vsel %vm714, 1, 0
    %v747 = vsel %vm715, 1, 0
    %v748 = vsel %vm716, 1, 0
    %v749 = vsel %vm717, 1, 0
    %v750 = vsel %vm718, 1, 0
    %v751 = vsel %vm719, 1, 0
    %v752 = vsel %vm720, 1, 0
    %v753 = vcvt.s32.f32 %v721
    %v754 = vcvt.s32.f32 %v722
    %v755 = vcvt.s32.f32 %v723
    %v756 = vcvt.s32.f32 %v724
    %v757 = vcvt.s32.f32 %v725
    %v758 = vcvt.s32.f32 %v726
    %v759 = vcvt.s32.f32 %v727
    %v760 = vcvt.s32.f32 %v728
    %v761 = vcvt.s32.f32 %v729
    %v762 = vcvt.s32.f32 %v730
    %v763 = vcvt.s32.f32 %v731
    %v764 = vcvt.s32.f32 %v732
    %v765 = vcvt.s32.f32 %v733
    %v766 = vcvt.s32.f32 %v734
    %v767 = vcvt.s32.f32 %v735
    %v768 = vcvt.s32.f32 %v736
    %v769 = vcvt.s32.f32 %v737
    %v770 = vcvt.s32.f32 %v738
    %v771 = vcvt.s32.f32 %v739
    %v772 = vcvt.s32.f32 %v740
    %v773 = vcvt.s32.f32 %v741
    %v774 = vcvt.s32.f32 %v742
    %v775 = vcvt.s32.f32 %v743
    %v776 = vcvt.s32.f32 %v744
    %v777 = vcvt.s32.f32 %v745
    %v778 = vcvt.s32.f32 %v746
    %v779 = vcvt.s32.f32 %v747
    %v780 = vcvt.s32.f32 %v748
    %v781 = vcvt.s32.f32 %v749
    %v782 = vcvt.s32.f32 %v750
    %v783 = vcvt.s32.f32 %v751
    %v784 = vcvt.s32.f32 %v752
    %v785 = vpack.c.bf16 %v755, %v753
    %v786 = vpack.c.bf16 %v756, %v754
    %v787 = vpack.c.bf16 %v759, %v757
    %v788 = vpack.c.bf16 %v760, %v758
    %v789 = vpack.c.bf16 %v763, %v761
    %v790 = vpack.c.bf16 %v764, %v762
    %v791 = vpack.c.bf16 %v767, %v765
    %v792 = vpack.c.bf16 %v768, %v766
    %v793 = vpack.c.bf16 %v771, %v769
    %v794 = vpack.c.bf16 %v772, %v770
    %v795 = vpack.c.bf16 %v775, %v773
    %v796 = vpack.c.bf16 %v776, %v774
    %v797 = vpack.c.bf16 %v779, %v777
    %v798 = vpack.c.bf16 %v780, %v778
    %v799 = vpack.c.bf16 %v783, %v781
    %v800 = vpack.c.bf16 %v784, %v782
    %v801 = vld [vmem:[#allocation5 + $0x8] sm:$0xf]
    %v802 = vld [vmem:[#allocation5 + $0x18] sm:$0xf]
    %v803 = vld [vmem:[#allocation5 + $0x28] sm:$0xf]
    %v804 = vld [vmem:[#allocation5 + $0x38] sm:$0xf]
    %v805 = vld [vmem:[#allocation5 + $0x48] sm:$0xf]
    %v806 = vld [vmem:[#allocation5 + $0x58] sm:$0xf]
    %v807 = vld [vmem:[#allocation5 + $0x68] sm:$0xf]
    %v808 = vld [vmem:[#allocation5 + $0x78] sm:$0xf]
    %v809 = vld [vmem:[#allocation5 + $0x88] sm:$0xf]
    %v810 = vld [vmem:[#allocation5 + $0x98] sm:$0xf]
    %v811 = vld [vmem:[#allocation5 + $0xa8] sm:$0xf]
    %v812 = vld [vmem:[#allocation5 + $0xb8] sm:$0xf]
    %v813 = vld [vmem:[#allocation5 + $0xc8] sm:$0xf]
    %v814 = vld [vmem:[#allocation5 + $0xd8] sm:$0xf]
    %v815 = vld [vmem:[#allocation5 + $0xe8] sm:$0xf]
    %v816 = vld [vmem:[#allocation5 + $0xf8] sm:$0xf]
    %v833 = vunpack.c.l.b16 %v801
    %v834 = vunpack.c.l.b16 %v802
    %v835 = vunpack.c.l.b16 %v803
    %v836 = vunpack.c.l.b16 %v804
    %v837 = vunpack.c.l.b16 %v805
    %v838 = vunpack.c.l.b16 %v806
    %v839 = vunpack.c.l.b16 %v807
    %v840 = vunpack.c.l.b16 %v808
    %v841 = vunpack.c.l.b16 %v809
    %v842 = vunpack.c.l.b16 %v810
    %v843 = vunpack.c.l.b16 %v811
    %v844 = vunpack.c.l.b16 %v812
    %v845 = vunpack.c.l.b16 %v813
    %v846 = vunpack.c.l.b16 %v814
    %v847 = vunpack.c.l.b16 %v815
    %v848 = vunpack.c.l.b16 %v816
    %v849 = vpack.c.b16 %v834, %v833
    %v850 = vpack.c.b16 %v836, %v835
    %v851 = vpack.c.b16 %v838, %v837
    %v852 = vpack.c.b16 %v840, %v839
    %v853 = vpack.c.b16 %v842, %v841
    %v854 = vpack.c.b16 %v844, %v843
    %v855 = vpack.c.b16 %v846, %v845
    %v856 = vpack.c.b16 %v848, %v847
    %865 = vmatprep.subr.bf16.mxu0 %v786
    %866 = vmatpush1.bf16.msra.mxu0 %v785
    %867 = vmatprep.subr.bf16.mxu0 %v788
    %868 = vmatpush1.bf16.msra.mxu0 %v787
    %869 = vmatprep.subr.bf16.mxu0 %v790
    %870 = vmatpush1.bf16.msra.mxu0 %v789
    %871 = vmatprep.subr.bf16.mxu0 %v792
    %872 = vmatpush1.bf16.msra.mxu0 %v791
    %873 = vmatprep.subr.bf16.mxu0 %v794
    %874 = vmatpush1.bf16.msra.mxu0 %v793
    %875 = vmatprep.subr.bf16.mxu0 %v796
    %876 = vmatpush1.bf16.msra.mxu0 %v795
    %877 = vmatprep.subr.bf16.mxu0 %v798
    %878 = vmatpush1.bf16.msra.mxu0 %v797
    %879 = vmatprep.subr.bf16.mxu0 %v800
    %880 = vmatpush1.bf16.msra.mxu0 %v799
    %881 = vmatprep.subr.bf16.mxu0 0
    %882 = vmatpush1.bf16.msra.mxu0 0
    %883 = vmatprep.subr.bf16.mxu0 0
    %884 = vmatpush1.bf16.msra.mxu0 0
    %885 = vmatprep.subr.bf16.mxu0 0
    %886 = vmatpush1.bf16.msra.mxu0 0
    %887 = vmatprep.subr.bf16.mxu0 0
    %888 = vmatpush1.bf16.msra.mxu0 0
    %889 = vmatprep.subr.bf16.mxu0 0
    %890 = vmatpush1.bf16.msra.mxu0 0
    %891 = vmatprep.subr.bf16.mxu0 0
    %892 = vmatpush1.bf16.msra.mxu0 0
    %893 = vmatprep.subr.bf16.mxu0 0
    %894 = vmatpush1.bf16.msra.mxu0 0
    %895 = vmatprep.subr.bf16.mxu0 0
    %896 = vmatpush1.bf16.msra.mxu0 0
    %897 = vmatprep.mubr.bf16.mxu0 0
    %898 = vmatmul.mubr.bf16.gmra.mrb[0].mxu0 %v849
    %v899 = vpop.f32.mrb[0].mxu0
    %v900 = vadd.f32 0.0, %v899
    %v901 = vpop.f32.mrb[0].mxu0
    %v902 = vadd.f32 0.0, %v901
    %v903 = vpop.f32.mrb[0].mxu0
    %v904 = vadd.f32 0.0, %v903
    %v905 = vpop.f32.mrb[0].mxu0
    %v906 = vadd.f32 0.0, %v905
    %907 = vmatprep.mubr.bf16.mxu0 0
    %908 = vmatmul.mubr.bf16.gmra.mrb[0].mxu0 %v850
    %v909 = vpop.f32.mrb[0].mxu0
    %v910 = vadd.f32 0.0, %v909
    %v911 = vpop.f32.mrb[0].mxu0
    %v912 = vadd.f32 0.0, %v911
    %v913 = vpop.f32.mrb[0].mxu0
    %v914 = vadd.f32 0.0, %v913
    %v915 = vpop.f32.mrb[0].mxu0
    %v916 = vadd.f32 0.0, %v915
    %917 = vmatprep.mubr.bf16.mxu0 0
    %918 = vmatmul.mubr.bf16.gmra.mrb[0].mxu0 %v851
    %v919 = vpop.f32.mrb[0].mxu0
    %v920 = vadd.f32 0.0, %v919
    %v921 = vpop.f32.mrb[0].mxu0
    %v922 = vadd.f32 0.0, %v921
    %v923 = vpop.f32.mrb[0].mxu0
    %v924 = vadd.f32 0.0, %v923
    %v925 = vpop.f32.mrb[0].mxu0
    %v926 = vadd.f32 0.0, %v925
    %927 = vmatprep.mubr.bf16.mxu0 0
    %928 = vmatmul.mubr.bf16.gmra.mrb[0].mxu0 %v852
    %v929 = vpop.f32.mrb[0].mxu0
    %v930 = vadd.f32 0.0, %v929
    %v931 = vpop.f32.mrb[0].mxu0
    %v932 = vadd.f32 0.0, %v931
    %v933 = vpop.f32.mrb[0].mxu0
    %v934 = vadd.f32 0.0, %v933
    %v935 = vpop.f32.mrb[0].mxu0
    %v936 = vadd.f32 0.0, %v935
    %937 = vmatprep.mubr.bf16.mxu0 0
    %938 = vmatmul.mubr.bf16.gmra.mrb[0].mxu0 %v853
    %v939 = vpop.f32.mrb[0].mxu0
    %v940 = vadd.f32 0.0, %v939
    %v941 = vpop.f32.mrb[0].mxu0
    %v942 = vadd.f32 0.0, %v941
    %v943 = vpop.f32.mrb[0].mxu0
    %v944 = vadd.f32 0.0, %v943
    %v945 = vpop.f32.mrb[0].mxu0
    %v946 = vadd.f32 0.0, %v945
    %947 = vmatprep.mubr.bf16.mxu0 0
    %948 = vmatmul.mubr.bf16.gmra.mrb[0].mxu0 %v854
    %v949 = vpop.f32.mrb[0].mxu0
    %v950 = vadd.f32 0.0, %v949
    %v951 = vpop.f32.mrb[0].mxu0
    %v952 = vadd.f32 0.0, %v951
    %v953 = vpop.f32.mrb[0].mxu0
    %v954 = vadd.f32 0.0, %v953
    %v955 = vpop.f32.mrb[0].mxu0
    %v956 = vadd.f32 0.0, %v955
    %957 = vmatprep.mubr.bf16.mxu0 0
    %958 = vmatmul.mubr.bf16.gmra.mrb[0].mxu0 %v855
    %v959 = vpop.f32.mrb[0].mxu0
    %v960 = vadd.f32 0.0, %v959
    %v961 = vpop.f32.mrb[0].mxu0
    %v962 = vadd.f32 0.0, %v961
    %v963 = vpop.f32.mrb[0].mxu0
    %v964 = vadd.f32 0.0, %v963
    %v965 = vpop.f32.mrb[0].mxu0
    %v966 = vadd.f32 0.0, %v965
    %967 = vmatprep.mubr.bf16.mxu0 0
    %968 = vmatmul.mubr.bf16.gmra.mrb[0].mxu0 %v856
    %v969 = vpop.f32.mrb[0].mxu0
    %v970 = vadd.f32 0.0, %v969
    %v971 = vpop.f32.mrb[0].mxu0
    %v972 = vadd.f32 0.0, %v971
    %v973 = vpop.f32.mrb[0].mxu0
    %v974 = vadd.f32 0.0, %v973
    %v975 = vpop.f32.mrb[0].mxu0
    %v976 = vadd.f32 0.0, %v975
    %977 = vdwg.mxu0
    %v978 = vadd.f32 %v595, %v900
    %v979 = vadd.f32 %v597, %v902
    %v980 = vadd.f32 %v599, %v904
    %v981 = vadd.f32 %v601, %v906
    %v982 = vadd.f32 %v605, %v910
    %v983 = vadd.f32 %v607, %v912
    %v984 = vadd.f32 %v609, %v914
    %v985 = vadd.f32 %v611, %v916
    %v986 = vadd.f32 %v615, %v920
    %v987 = vadd.f32 %v617, %v922
    %v988 = vadd.f32 %v619, %v924
    %v989 = vadd.f32 %v621, %v926
    %v990 = vadd.f32 %v625, %v930
    %v991 = vadd.f32 %v627, %v932
    %v992 = vadd.f32 %v629, %v934
    %v993 = vadd.f32 %v631, %v936
    %v994 = vadd.f32 %v635, %v940
    %v995 = vadd.f32 %v637, %v942
    %v996 = vadd.f32 %v639, %v944
    %v997 = vadd.f32 %v641, %v946
    %v998 = vadd.f32 %v645, %v950
    %v999 = vadd.f32 %v647, %v952
    %v1000 = vadd.f32 %v649, %v954
    %v1001 = vadd.f32 %v651, %v956
    %v1002 = vadd.f32 %v655, %v960
    %v1003 = vadd.f32 %v657, %v962
    %v1004 = vadd.f32 %v659, %v964
    %v1005 = vadd.f32 %v661, %v966
    %v1006 = vadd.f32 %v665, %v970
    %v1007 = vadd.f32 %v667, %v972
    %v1008 = vadd.f32 %v669, %v974
    %v1009 = vadd.f32 %v671, %v976
    %v1010 = vadd.s32 %v55, 384
    %v1011 = vadd.s32 %v56, 384
    %v1012 = vadd.s32 %v57, 384
    %v1013 = vadd.s32 %v58, 384
    %v1014 = vadd.s32 %v59, 384
    %v1015 = vadd.s32 %v60, 384
    %v1016 = vadd.s32 %v61, 384
    %v1017 = vadd.s32 %v62, 384
    %v1018 = vadd.s32 %v63, 384
    %v1019 = vadd.s32 %v64, 384
    %v1020 = vadd.s32 %v65, 384
    %v1021 = vadd.s32 %v66, 384
    %v1022 = vadd.s32 %v67, 384
    %v1023 = vadd.s32 %v68, 384
    %v1024 = vadd.s32 %v69, 384
    %v1025 = vadd.s32 %v70, 384
    %vm1026 = vcmp.eq.s32.totalorder %v1010, %v74
    %vm1027 = vcmp.eq.s32.totalorder %v1010, %v78
    %vm1028 = vcmp.eq.s32.totalorder %v1011, %v74
    %vm1029 = vcmp.eq.s32.totalorder %v1011, %v78
    %vm1030 = vcmp.eq.s32.totalorder %v1012, %v74
    %vm1031 = vcmp.eq.s32.totalorder %v1012, %v78
    %vm1032 = vcmp.eq.s32.totalorder %v1013, %v74
    %vm1033 = vcmp.eq.s32.totalorder %v1013, %v78
    %vm1034 = vcmp.eq.s32.totalorder %v1014, %v74
    %vm1035 = vcmp.eq.s32.totalorder %v1014, %v78
    %vm1036 = vcmp.eq.s32.totalorder %v1015, %v74
    %vm1037 = vcmp.eq.s32.totalorder %v1015, %v78
    %vm1038 = vcmp.eq.s32.totalorder %v1016, %v74
    %vm1039 = vcmp.eq.s32.totalorder %v1016, %v78
    %vm1040 = vcmp.eq.s32.totalorder %v1017, %v74
    %vm1041 = vcmp.eq.s32.totalorder %v1017, %v78
    %vm1042 = vcmp.eq.s32.totalorder %v1018, %v74
    %vm1043 = vcmp.eq.s32.totalorder %v1018, %v78
    %vm1044 = vcmp.eq.s32.totalorder %v1019, %v74
    %vm1045 = vcmp.eq.s32.totalorder %v1019, %v78
    %vm1046 = vcmp.eq.s32.totalorder %v1020, %v74
    %vm1047 = vcmp.eq.s32.totalorder %v1020, %v78
    %vm1048 = vcmp.eq.s32.totalorder %v1021, %v74
    %vm1049 = vcmp.eq.s32.totalorder %v1021, %v78
    %vm1050 = vcmp.eq.s32.totalorder %v1022, %v74
    %vm1051 = vcmp.eq.s32.totalorder %v1022, %v78
    %vm1052 = vcmp.eq.s32.totalorder %v1023, %v74
    %vm1053 = vcmp.eq.s32.totalorder %v1023, %v78
    %vm1054 = vcmp.eq.s32.totalorder %v1024, %v74
    %vm1055 = vcmp.eq.s32.totalorder %v1024, %v78
    %vm1056 = vcmp.eq.s32.totalorder %v1025, %v74
    %vm1057 = vcmp.eq.s32.totalorder %v1025, %v78
    %v1058 = vsel %vm1026, 1, 0
    %v1059 = vsel %vm1027, 1, 0
    %v1060 = vsel %vm1028, 1, 0
    %v1061 = vsel %vm1029, 1, 0
    %v1062 = vsel %vm1030, 1, 0
    %v1063 = vsel %vm1031, 1, 0
    %v1064 = vsel %vm1032, 1, 0
    %v1065 = vsel %vm1033, 1, 0
    %v1066 = vsel %vm1034, 1, 0
    %v1067 = vsel %vm1035, 1, 0
    %v1068 = vsel %vm1036, 1, 0
    %v1069 = vsel %vm1037, 1, 0
    %v1070 = vsel %vm1038, 1, 0
    %v1071 = vsel %vm1039, 1, 0
    %v1072 = vsel %vm1040, 1, 0
    %v1073 = vsel %vm1041, 1, 0
    %v1074 = vsel %vm1042, 1, 0
    %v1075 = vsel %vm1043, 1, 0
    %v1076 = vsel %vm1044, 1, 0
    %v1077 = vsel %vm1045, 1, 0
    %v1078 = vsel %vm1046, 1, 0
    %v1079 = vsel %vm1047, 1, 0
    %v1080 = vsel %vm1048, 1, 0
    %v1081 = vsel %vm1049, 1, 0
    %v1082 = vsel %vm1050, 1, 0
    %v1083 = vsel %vm1051, 1, 0
    %v1084 = vsel %vm1052, 1, 0
    %v1085 = vsel %vm1053, 1, 0
    %v1086 = vsel %vm1054, 1, 0
    %v1087 = vsel %vm1055, 1, 0
    %v1088 = vsel %vm1056, 1, 0
    %v1089 = vsel %vm1057, 1, 0
    %v1090 = vcvt.s32.f32 %v1058
    %v1091 = vcvt.s32.f32 %v1059
    %v1092 = vcvt.s32.f32 %v1060
    %v1093 = vcvt.s32.f32 %v1061
    %v1094 = vcvt.s32.f32 %v1062
    %v1095 = vcvt.s32.f32 %v1063
    %v1096 = vcvt.s32.f32 %v1064
    %v1097 = vcvt.s32.f32 %v1065
    %v1098 = vcvt.s32.f32 %v1066
    %v1099 = vcvt.s32.f32 %v1067
    %v1100 = vcvt.s32.f32 %v1068
    %v1101 = vcvt.s32.f32 %v1069
    %v1102 = vcvt.s32.f32 %v1070
    %v1103 = vcvt.s32.f32 %v1071
    %v1104 = vcvt.s32.f32 %v1072
    %v1105 = vcvt.s32.f32 %v1073
    %v1106 = vcvt.s32.f32 %v1074
    %v1107 = vcvt.s32.f32 %v1075
    %v1108 = vcvt.s32.f32 %v1076
    %v1109 = vcvt.s32.f32 %v1077
    %v1110 = vcvt.s32.f32 %v1078
    %v1111 = vcvt.s32.f32 %v1079
    %v1112 = vcvt.s32.f32 %v1080
    %v1113 = vcvt.s32.f32 %v1081
    %v1114 = vcvt.s32.f32 %v1082
    %v1115 = vcvt.s32.f32 %v1083
    %v1116 = vcvt.s32.f32 %v1084
    %v1117 = vcvt.s32.f32 %v1085
    %v1118 = vcvt.s32.f32 %v1086
    %v1119 = vcvt.s32.f32 %v1087
    %v1120 = vcvt.s32.f32 %v1088
    %v1121 = vcvt.s32.f32 %v1089
    %v1122 = vpack.c.bf16 %v1092, %v1090
    %v1123 = vpack.c.bf16 %v1093, %v1091
    %v1124 = vpack.c.bf16 %v1096, %v1094
    %v1125 = vpack.c.bf16 %v1097, %v1095
    %v1126 = vpack.c.bf16 %v1100, %v1098
    %v1127 = vpack.c.bf16 %v1101, %v1099
    %v1128 = vpack.c.bf16 %v1104, %v1102
    %v1129 = vpack.c.bf16 %v1105, %v1103
    %v1130 = vpack.c.bf16 %v1108, %v1106
    %v1131 = vpack.c.bf16 %v1109, %v1107
    %v1132 = vpack.c.bf16 %v1112, %v1110
    %v1133 = vpack.c.bf16 %v1113, %v1111
    %v1134 = vpack.c.bf16 %v1116, %v1114
    %v1135 = vpack.c.bf16 %v1117, %v1115
    %v1136 = vpack.c.bf16 %v1120, %v1118
    %v1137 = vpack.c.bf16 %v1121, %v1119
    %v1138 = vld [vmem:[#allocation5 + $0xc] sm:$0xf]
    %v1139 = vld [vmem:[#allocation5 + $0x1c] sm:$0xf]
    %v1140 = vld [vmem:[#allocation5 + $0x2c] sm:$0xf]
    %v1141 = vld [vmem:[#allocation5 + $0x3c] sm:$0xf]
    %v1142 = vld [vmem:[#allocation5 + $0x4c] sm:$0xf]
    %v1143 = vld [vmem:[#allocation5 + $0x5c] sm:$0xf]
    %v1144 = vld [vmem:[#allocation5 + $0x6c] sm:$0xf]
    %v1145 = vld [vmem:[#allocation5 + $0x7c] sm:$0xf]
    %v1146 = vld [vmem:[#allocation5 + $0x8c] sm:$0xf]
    %v1147 = vld [vmem:[#allocation5 + $0x9c] sm:$0xf]
    %v1148 = vld [vmem:[#allocation5 + $0xac] sm:$0xf]
    %v1149 = vld [vmem:[#allocation5 + $0xbc] sm:$0xf]
    %v1150 = vld [vmem:[#allocation5 + $0xcc] sm:$0xf]
    %v1151 = vld [vmem:[#allocation5 + $0xdc] sm:$0xf]
    %v1152 = vld [vmem:[#allocation5 + $0xec] sm:$0xf]
    %v1153 = vld [vmem:[#allocation5 + $0xfc] sm:$0xf]
    %v1170 = vunpack.c.l.b16 %v1138
    %v1171 = vunpack.c.l.b16 %v1139
    %v1172 = vunpack.c.l.b16 %v1140
    %v1173 = vunpack.c.l.b16 %v1141
    %v1174 = vunpack.c.l.b16 %v1142
    %v1175 = vunpack.c.l.b16 %v1143
    %v1176 = vunpack.c.l.b16 %v1144
    %v1177 = vunpack.c.l.b16 %v1145
    %v1178 = vunpack.c.l.b16 %v1146
    %v1179 = vunpack.c.l.b16 %v1147
    %v1180 = vunpack.c.l.b16 %v1148
    %v1181 = vunpack.c.l.b16 %v1149
    %v1182 = vunpack.c.l.b16 %v1150
    %v1183 = vunpack.c.l.b16 %v1151
    %v1184 = vunpack.c.l.b16 %v1152
    %v1185 = vunpack.c.l.b16 %v1153
    %v1186 = vpack.c.b16 %v1171, %v1170
    %v1187 = vpack.c.b16 %v1173, %v1172
    %v1188 = vpack.c.b16 %v1175, %v1174
    %v1189 = vpack.c.b16 %v1177, %v1176
    %v1190 = vpack.c.b16 %v1179, %v1178
    %v1191 = vpack.c.b16 %v1181, %v1180
    %v1192 = vpack.c.b16 %v1183, %v1182
    %v1193 = vpack.c.b16 %v1185, %v1184
    %1202 = vmatprep.subr.bf16.mxu0 %v1123
    %1203 = vmatpush1.bf16.msra.mxu0 %v1122
    %1204 = vmatprep.subr.bf16.mxu0 %v1125
    %1205 = vmatpush1.bf16.msra.mxu0 %v1124
    %1206 = vmatprep.subr.bf16.mxu0 %v1127
    %1207 = vmatpush1.bf16.msra.mxu0 %v1126
    %1208 = vmatprep.subr.bf16.mxu0 %v1129
    %1209 = vmatpush1.bf16.msra.mxu0 %v1128
    %1210 = vmatprep.subr.bf16.mxu0 %v1131
    %1211 = vmatpush1.bf16.msra.mxu0 %v1130
    %1212 = vmatprep.subr.bf16.mxu0 %v1133
    %1213 = vmatpush1.bf16.msra.mxu0 %v1132
    %1214 = vmatprep.subr.bf16.mxu0 %v1135
    %1215 = vmatpush1.bf16.msra.mxu0 %v1134
    %1216 = vmatprep.subr.bf16.mxu0 %v1137
    %1217 = vmatpush1.bf16.msra.mxu0 %v1136
    %1218 = vmatprep.subr.bf16.mxu0 0
    %1219 = vmatpush1.bf16.msra.mxu0 0
    %1220 = vmatprep.subr.bf16.mxu0 0
    %1221 = vmatpush1.bf16.msra.mxu0 0
    %1222 = vmatprep.subr.bf16.mxu0 0
    %1223 = vmatpush1.bf16.msra.mxu0 0
    %1224 = vmatprep.subr.bf16.mxu0 0
    %1225 = vmatpush1.bf16.msra.mxu0 0
    %1226 = vmatprep.subr.bf16.mxu0 0
    %1227 = vmatpush1.bf16.msra.mxu0 0
    %1228 = vmatprep.subr.bf16.mxu0 0
    %1229 = vmatpush1.bf16.msra.mxu0 0
    %1230 = vmatprep.subr.bf16.mxu0 0
    %1231 = vmatpush1.bf16.msra.mxu0 0
    %1232 = vmatprep.subr.bf16.mxu0 0
    %1233 = vmatpush1.bf16.msra.mxu0 0
    %1234 = vmatprep.mubr.bf16.mxu0 0
    %1235 = vmatmul.mubr.bf16.gmra.mrb[0].mxu0 %v1186
    %v1236 = vpop.f32.mrb[0].mxu0
    %v1237 = vadd.f32 0.0, %v1236
    %v1238 = vpop.f32.mrb[0].mxu0
    %v1239 = vadd.f32 0.0, %v1238
    %v1240 = vpop.f32.mrb[0].mxu0
    %v1241 = vadd.f32 0.0, %v1240
    %v1242 = vpop.f32.mrb[0].mxu0
    %v1243 = vadd.f32 0.0, %v1242
    %1244 = vmatprep.mubr.bf16.mxu0 0
    %1245 = vmatmul.mubr.bf16.gmra.mrb[0].mxu0 %v1187
    %v1246 = vpop.f32.mrb[0].mxu0
    %v1247 = vadd.f32 0.0, %v1246
    %v1248 = vpop.f32.mrb[0].mxu0
    %v1249 = vadd.f32 0.0, %v1248
    %v1250 = vpop.f32.mrb[0].mxu0
    %v1251 = vadd.f32 0.0, %v1250
    %v1252 = vpop.f32.mrb[0].mxu0
    %v1253 = vadd.f32 0.0, %v1252
    %1254 = vmatprep.mubr.bf16.mxu0 0
    %1255 = vmatmul.mubr.bf16.gmra.mrb[0].mxu0 %v1188
    %v1256 = vpop.f32.mrb[0].mxu0
    %v1257 = vadd.f32 0.0, %v1256
    %v1258 = vpop.f32.mrb[0].mxu0
    %v1259 = vadd.f32 0.0, %v1258
    %v1260 = vpop.f32.mrb[0].mxu0
    %v1261 = vadd.f32 0.0, %v1260
    %v1262 = vpop.f32.mrb[0].mxu0
    %v1263 = vadd.f32 0.0, %v1262
    %1264 = vmatprep.mubr.bf16.mxu0 0
    %1265 = vmatmul.mubr.bf16.gmra.mrb[0].mxu0 %v1189
    %v1266 = vpop.f32.mrb[0].mxu0
    %v1267 = vadd.f32 0.0, %v1266
    %v1268 = vpop.f32.mrb[0].mxu0
    %v1269 = vadd.f32 0.0, %v1268
    %v1270 = vpop.f32.mrb[0].mxu0
    %v1271 = vadd.f32 0.0, %v1270
    %v1272 = vpop.f32.mrb[0].mxu0
    %v1273 = vadd.f32 0.0, %v1272
    %1274 = vmatprep.mubr.bf16.mxu0 0
    %1275 = vmatmul.mubr.bf16.gmra.mrb[0].mxu0 %v1190
    %v1276 = vpop.f32.mrb[0].mxu0
    %v1277 = vadd.f32 0.0, %v1276
    %v1278 = vpop.f32.mrb[0].mxu0
    %v1279 = vadd.f32 0.0, %v1278
    %v1280 = vpop.f32.mrb[0].mxu0
    %v1281 = vadd.f32 0.0, %v1280
    %v1282 = vpop.f32.mrb[0].mxu0
    %v1283 = vadd.f32 0.0, %v1282
    %1284 = vmatprep.mubr.bf16.mxu0 0
    %1285 = vmatmul.mubr.bf16.gmra.mrb[0].mxu0 %v1191
    %v1286 = vpop.f32.mrb[0].mxu0
    %v1287 = vadd.f32 0.0, %v1286
    %v1288 = vpop.f32.mrb[0].mxu0
    %v1289 = vadd.f32 0.0, %v1288
    %v1290 = vpop.f32.mrb[0].mxu0
    %v1291 = vadd.f32 0.0, %v1290
    %v1292 = vpop.f32.mrb[0].mxu0
    %v1293 = vadd.f32 0.0, %v1292
    %1294 = vmatprep.mubr.bf16.mxu0 0
    %1295 = vmatmul.mubr.bf16.gmra.mrb[0].mxu0 %v1192
    %v1296 = vpop.f32.mrb[0].mxu0
    %v1297 = vadd.f32 0.0, %v1296
    %v1298 = vpop.f32.mrb[0].mxu0
    %v1299 = vadd.f32 0.0, %v1298
    %v1300 = vpop.f32.mrb[0].mxu0
    %v1301 = vadd.f32 0.0, %v1300
    %v1302 = vpop.f32.mrb[0].mxu0
    %v1303 = vadd.f32 0.0, %v1302
    %1304 = vmatprep.mubr.bf16.mxu0 0
    %1305 = vmatmul.mubr.bf16.gmra.mrb[0].mxu0 %v1193
    %v1306 = vpop.f32.mrb[0].mxu0
    %v1307 = vadd.f32 0.0, %v1306
    %v1308 = vpop.f32.mrb[0].mxu0
    %v1309 = vadd.f32 0.0, %v1308
    %v1310 = vpop.f32.mrb[0].mxu0
    %v1311 = vadd.f32 0.0, %v1310
    %v1312 = vpop.f32.mrb[0].mxu0
    %v1313 = vadd.f32 0.0, %v1312
    %1314 = vdwg.mxu0
    %v1315 = vadd.f32 %v978, %v1237
    %v1316 = vadd.f32 %v979, %v1239
    %v1317 = vadd.f32 %v980, %v1241
    %v1318 = vadd.f32 %v981, %v1243
    %v1319 = vadd.f32 %v982, %v1247
    %v1320 = vadd.f32 %v983, %v1249
    %v1321 = vadd.f32 %v984, %v1251
    %v1322 = vadd.f32 %v985, %v1253
    %v1323 = vadd.f32 %v986, %v1257
    %v1324 = vadd.f32 %v987, %v1259
    %v1325 = vadd.f32 %v988, %v1261
    %v1326 = vadd.f32 %v989, %v1263
    %v1327 = vadd.f32 %v990, %v1267
    %v1328 = vadd.f32 %v991, %v1269
    %v1329 = vadd.f32 %v992, %v1271
    %v1330 = vadd.f32 %v993, %v1273
    %v1331 = vadd.f32 %v994, %v1277
    %v1332 = vadd.f32 %v995, %v1279
    %v1333 = vadd.f32 %v996, %v1281
    %v1334 = vadd.f32 %v997, %v1283
    %v1335 = vadd.f32 %v998, %v1287
    %v1336 = vadd.f32 %v999, %v1289
    %v1337 = vadd.f32 %v1000, %v1291
    %v1338 = vadd.f32 %v1001, %v1293
    %v1339 = vadd.f32 %v1002, %v1297
    %v1340 = vadd.f32 %v1003, %v1299
    %v1341 = vadd.f32 %v1004, %v1301
    %v1342 = vadd.f32 %v1005, %v1303
    %v1343 = vadd.f32 %v1006, %v1307
    %v1344 = vadd.f32 %v1007, %v1309
    %v1345 = vadd.f32 %v1008, %v1311
    %v1346 = vadd.f32 %v1009, %v1313
    %1347 = vxpose.xlu0.b32.start [1/16] %v1315, 128
    %1348 = vxpose.xlu0.b32.cont [2/16] %v1317, 128
    %1349 = vxpose.xlu0.b32.cont [3/16] %v1319, 128
    %1350 = vxpose.xlu0.b32.cont [4/16] %v1321, 128
    %1351 = vxpose.xlu0.b32.cont [5/16] %v1323, 128
    %1352 = vxpose.xlu0.b32.cont [6/16] %v1325, 128
    %1353 = vxpose.xlu0.b32.cont [7/16] %v1327, 128
    %1354 = vxpose.xlu0.b32.cont [8/16] %v1329, 128
    %1355 = vxpose.xlu0.b32.cont [9/16] %v1331, 128
    %1356 = vxpose.xlu0.b32.cont [10/16] %v1333, 128
    %1357 = vxpose.xlu0.b32.cont [11/16] %v1335, 128
    %1358 = vxpose.xlu0.b32.cont [12/16] %v1337, 128
    %1359 = vxpose.xlu0.b32.cont [13/16] %v1339, 128
    %1360 = vxpose.xlu0.b32.cont [14/16] %v1341, 128
    %1361 = vxpose.xlu0.b32.cont [15/16] %v1343, 128
    %1362 = vxpose.xlu0.b32.end [16/16] %v1345, 128
    %v1363 = vpop.trf.xlu0
    %v1364 = vpop.trf.xlu0
    %v1365 = vpop.trf.xlu0
    %v1366 = vpop.trf.xlu0
    %v1367 = vpop.trf.xlu0
    %v1368 = vpop.trf.xlu0
    %v1369 = vpop.trf.xlu0
    %v1370 = vpop.trf.xlu0
    %v1371 = vpop.trf.xlu0
    %v1372 = vpop.trf.xlu0
    %v1373 = vpop.trf.xlu0
    %v1374 = vpop.trf.xlu0
    %v1375 = vpop.trf.xlu0
    %v1376 = vpop.trf.xlu0
    %v1377 = vpop.trf.xlu0
    %v1378 = vpop.trf.xlu0
    %1379 = vxpose.xlu0.b32.start [1/16] %v1316, 128
    %1380 = vxpose.xlu0.b32.cont [2/16] %v1318, 128
    %1381 = vxpose.xlu0.b32.cont [3/16] %v1320, 128
    %1382 = vxpose.xlu0.b32.cont [4/16] %v1322, 128
    %1383 = vxpose.xlu0.b32.cont [5/16] %v1324, 128
    %1384 = vxpose.xlu0.b32.cont [6/16] %v1326, 128
    %1385 = vxpose.xlu0.b32.cont [7/16] %v1328, 128
    %1386 = vxpose.xlu0.b32.cont [8/16] %v1330, 128
    %1387 = vxpose.xlu0.b32.cont [9/16] %v1332, 128
    %1388 = vxpose.xlu0.b32.cont [10/16] %v1334, 128
    %1389 = vxpose.xlu0.b32.cont [11/16] %v1336, 128
    %1390 = vxpose.xlu0.b32.cont [12/16] %v1338, 128
    %1391 = vxpose.xlu0.b32.cont [13/16] %v1340, 128
    %1392 = vxpose.xlu0.b32.cont [14/16] %v1342, 128
    %1393 = vxpose.xlu0.b32.cont [15/16] %v1344, 128
    %1394 = vxpose.xlu0.b32.end [16/16] %v1346, 128
    %v1395 = vpop.trf.xlu0
    %v1396 = vpop.trf.xlu0
    %v1397 = vpop.trf.xlu0
    %v1398 = vpop.trf.xlu0
    %v1399 = vpop.trf.xlu0
    %v1400 = vpop.trf.xlu0
    %v1401 = vpop.trf.xlu0
    %v1402 = vpop.trf.xlu0
    %v1403 = vpop.trf.xlu0
    %v1404 = vpop.trf.xlu0
    %v1405 = vpop.trf.xlu0
    %v1406 = vpop.trf.xlu0
    %v1407 = vpop.trf.xlu0
    %v1408 = vpop.trf.xlu0
    %v1409 = vpop.trf.xlu0
    %v1410 = vpop.trf.xlu0
    %v1411 = vld [vmem:[#allocation7] sm:$0x1]
    %v1412 = vlaneseq
    %v1413 = vshrl.u32 %v1412, 7
    %v1414 = vsub.s32 0, %v1413
    %v1415 = vrot.slane %v1411, %v1414
    %v1416 = vadd.f32 %v1363, %v1415
    %v1417 = vadd.f32 %v1364, %v1415
    %v1418 = vadd.f32 %v1365, %v1415
    %v1419 = vadd.f32 %v1366, %v1415
    %v1420 = vadd.f32 %v1367, %v1415
    %v1421 = vadd.f32 %v1368, %v1415
    %v1422 = vadd.f32 %v1369, %v1415
    %v1423 = vadd.f32 %v1370, %v1415
    %v1424 = vadd.f32 %v1371, %v1415
    %v1425 = vadd.f32 %v1372, %v1415
    %v1426 = vadd.f32 %v1373, %v1415
    %v1427 = vadd.f32 %v1374, %v1415
    %v1428 = vadd.f32 %v1375, %v1415
    %v1429 = vadd.f32 %v1376, %v1415
    %v1430 = vadd.f32 %v1377, %v1415
    %v1431 = vadd.f32 %v1378, %v1415
    %v1432 = vadd.f32 %v1395, %v1415
    %v1433 = vadd.f32 %v1396, %v1415
    %v1434 = vadd.f32 %v1397, %v1415
    %v1435 = vadd.f32 %v1398, %v1415
    %v1436 = vadd.f32 %v1399, %v1415
    %v1437 = vadd.f32 %v1400, %v1415
    %v1438 = vadd.f32 %v1401, %v1415
    %v1439 = vadd.f32 %v1402, %v1415
    %v1440 = vadd.f32 %v1403, %v1415
    %v1441 = vadd.f32 %v1404, %v1415
    %v1442 = vadd.f32 %v1405, %v1415
    %v1443 = vadd.f32 %v1406, %v1415
    %v1444 = vadd.f32 %v1407, %v1415
    %v1445 = vadd.f32 %v1408, %v1415
    %v1446 = vadd.f32 %v1409, %v1415
    %v1447 = vadd.f32 %v1410, %v1415
    %1448 = vadd.xlane.f32.xlu0 %v1416
    %v1449 = vpop.xlane.xlu0 %1448
    %1450 = vadd.xlane.f32.xlu0 %v1417
    %v1451 = vpop.xlane.xlu0 %1450
    %1452 = vadd.xlane.f32.xlu0 %v1418
    %v1453 = vpop.xlane.xlu0 %1452
    %1454 = vadd.xlane.f32.xlu0 %v1419
    %v1455 = vpop.xlane.xlu0 %1454
    %1456 = vadd.xlane.f32.xlu0 %v1420
    %v1457 = vpop.xlane.xlu0 %1456
    %1458 = vadd.xlane.f32.xlu0 %v1421
    %v1459 = vpop.xlane.xlu0 %1458
    %1460 = vadd.xlane.f32.xlu0 %v1422
    %v1461 = vpop.xlane.xlu0 %1460
    %1462 = vadd.xlane.f32.xlu0 %v1423
    %v1463 = vpop.xlane.xlu0 %1462
    %1464 = vadd.xlane.f32.xlu0 %v1424
    %v1465 = vpop.xlane.xlu0 %1464
    %1466 = vadd.xlane.f32.xlu0 %v1425
    %v1467 = vpop.xlane.xlu0 %1466
    %1468 = vadd.xlane.f32.xlu0 %v1426
    %v1469 = vpop.xlane.xlu0 %1468
    %1470 = vadd.xlane.f32.xlu0 %v1427
    %v1471 = vpop.xlane.xlu0 %1470
    %1472 = vadd.xlane.f32.xlu0 %v1428
    %v1473 = vpop.xlane.xlu0 %1472
    %1474 = vadd.xlane.f32.xlu0 %v1429
    %v1475 = vpop.xlane.xlu0 %1474
    %1476 = vadd.xlane.f32.xlu0 %v1430
    %v1477 = vpop.xlane.xlu0 %1476
    %1478 = vadd.xlane.f32.xlu0 %v1431
    %v1479 = vpop.xlane.xlu0 %1478
    %1480 = vadd.xlane.f32.xlu0 %v1432
    %v1481 = vpop.xlane.xlu0 %1480
    %1482 = vadd.xlane.f32.xlu0 %v1433
    %v1483 = vpop.xlane.xlu0 %1482
    %1484 = vadd.xlane.f32.xlu0 %v1434
    %v1485 = vpop.xlane.xlu0 %1484
    %1486 = vadd.xlane.f32.xlu0 %v1435
    %v1487 = vpop.xlane.xlu0 %1486
    %1488 = vadd.xlane.f32.xlu0 %v1436
    %v1489 = vpop.xlane.xlu0 %1488
    %1490 = vadd.xlane.f32.xlu0 %v1437
    %v1491 = vpop.xlane.xlu0 %1490
    %1492 = vadd.xlane.f32.xlu0 %v1438
    %v1493 = vpop.xlane.xlu0 %1492
    %1494 = vadd.xlane.f32.xlu0 %v1439
    %v1495 = vpop.xlane.xlu0 %1494
    %1496 = vadd.xlane.f32.xlu0 %v1440
    %v1497 = vpop.xlane.xlu0 %1496
    %1498 = vadd.xlane.f32.xlu0 %v1441
    %v1499 = vpop.xlane.xlu0 %1498
    %1500 = vadd.xlane.f32.xlu0 %v1442
    %v1501 = vpop.xlane.xlu0 %1500
    %1502 = vadd.xlane.f32.xlu0 %v1443
    %v1503 = vpop.xlane.xlu0 %1502
    %1504 = vadd.xlane.f32.xlu0 %v1444
    %v1505 = vpop.xlane.xlu0 %1504
    %1506 = vadd.xlane.f32.xlu0 %v1445
    %v1507 = vpop.xlane.xlu0 %1506
    %1508 = vadd.xlane.f32.xlu0 %v1446
    %v1509 = vpop.xlane.xlu0 %1508
    %1510 = vadd.xlane.f32.xlu0 %v1447
    %v1511 = vpop.xlane.xlu0 %1510
    %v1512 = vmul.f32 %v1416, %v1416
    %v1513 = vmul.f32 %v1417, %v1417
    %v1514 = vmul.f32 %v1418, %v1418
    %v1515 = vmul.f32 %v1419, %v1419
    %v1516 = vmul.f32 %v1420, %v1420
    %v1517 = vmul.f32 %v1421, %v1421
    %v1518 = vmul.f32 %v1422, %v1422
    %v1519 = vmul.f32 %v1423, %v1423
    %v1520 = vmul.f32 %v1424, %v1424
    %v1521 = vmul.f32 %v1425, %v1425
    %v1522 = vmul.f32 %v1426, %v1426
    %v1523 = vmul.f32 %v1427, %v1427
    %v1524 = vmul.f32 %v1428, %v1428
    %v1525 = vmul.f32 %v1429, %v1429
    %v1526 = vmul.f32 %v1430, %v1430
    %v1527 = vmul.f32 %v1431, %v1431
    %v1528 = vmul.f32 %v1432, %v1432
    %v1529 = vmul.f32 %v1433, %v1433
    %v1530 = vmul.f32 %v1434, %v1434
    %v1531 = vmul.f32 %v1435, %v1435
    %v1532 = vmul.f32 %v1436, %v1436
    %v1533 = vmul.f32 %v1437, %v1437
    %v1534 = vmul.f32 %v1438, %v1438
    %v1535 = vmul.f32 %v1439, %v1439
    %v1536 = vmul.f32 %v1440, %v1440
    %v1537 = vmul.f32 %v1441, %v1441
    %v1538 = vmul.f32 %v1442, %v1442
    %v1539 = vmul.f32 %v1443, %v1443
    %v1540 = vmul.f32 %v1444, %v1444
    %v1541 = vmul.f32 %v1445, %v1445
    %v1542 = vmul.f32 %v1446, %v1446
    %v1543 = vmul.f32 %v1447, %v1447
    %1544 = vadd.xlane.f32.xlu0 %v1512
    %v1545 = vpop.xlane.xlu0 %1544
    %1546 = vadd.xlane.f32.xlu0 %v1513
    %v1547 = vpop.xlane.xlu0 %1546
    %1548 = vadd.xlane.f32.xlu0 %v1514
    %v1549 = vpop.xlane.xlu0 %1548
    %1550 = vadd.xlane.f32.xlu0 %v1515
    %v1551 = vpop.xlane.xlu0 %1550
    %1552 = vadd.xlane.f32.xlu0 %v1516
    %v1553 = vpop.xlane.xlu0 %1552
    %1554 = vadd.xlane.f32.xlu0 %v1517
    %v1555 = vpop.xlane.xlu0 %1554
    %1556 = vadd.xlane.f32.xlu0 %v1518
    %v1557 = vpop.xlane.xlu0 %1556
    %1558 = vadd.xlane.f32.xlu0 %v1519
    %v1559 = vpop.xlane.xlu0 %1558
    %1560 = vadd.xlane.f32.xlu0 %v1520
    %v1561 = vpop.xlane.xlu0 %1560
    %1562 = vadd.xlane.f32.xlu0 %v1521
    %v1563 = vpop.xlane.xlu0 %1562
    %1564 = vadd.xlane.f32.xlu0 %v1522
    %v1565 = vpop.xlane.xlu0 %1564
    %1566 = vadd.xlane.f32.xlu0 %v1523
    %v1567 = vpop.xlane.xlu0 %1566
    %1568 = vadd.xlane.f32.xlu0 %v1524
    %v1569 = vpop.xlane.xlu0 %1568
    %1570 = vadd.xlane.f32.xlu0 %v1525
    %v1571 = vpop.xlane.xlu0 %1570
    %1572 = vadd.xlane.f32.xlu0 %v1526
    %v1573 = vpop.xlane.xlu0 %1572
    %1574 = vadd.xlane.f32.xlu0 %v1527
    %v1575 = vpop.xlane.xlu0 %1574
    %1576 = vadd.xlane.f32.xlu0 %v1528
    %v1577 = vpop.xlane.xlu0 %1576
    %1578 = vadd.xlane.f32.xlu0 %v1529
    %v1579 = vpop.xlane.xlu0 %1578
    %1580 = vadd.xlane.f32.xlu0 %v1530
    %v1581 = vpop.xlane.xlu0 %1580
    %1582 = vadd.xlane.f32.xlu0 %v1531
    %v1583 = vpop.xlane.xlu0 %1582
    %1584 = vadd.xlane.f32.xlu0 %v1532
    %v1585 = vpop.xlane.xlu0 %1584
    %1586 = vadd.xlane.f32.xlu0 %v1533
    %v1587 = vpop.xlane.xlu0 %1586
    %1588 = vadd.xlane.f32.xlu0 %v1534
    %v1589 = vpop.xlane.xlu0 %1588
    %1590 = vadd.xlane.f32.xlu0 %v1535
    %v1591 = vpop.xlane.xlu0 %1590
    %1592 = vadd.xlane.f32.xlu0 %v1536
    %v1593 = vpop.xlane.xlu0 %1592
    %1594 = vadd.xlane.f32.xlu0 %v1537
    %v1595 = vpop.xlane.xlu0 %1594
    %1596 = vadd.xlane.f32.xlu0 %v1538
    %v1597 = vpop.xlane.xlu0 %1596
    %1598 = vadd.xlane.f32.xlu0 %v1539
    %v1599 = vpop.xlane.xlu0 %1598
    %1600 = vadd.xlane.f32.xlu0 %v1540
    %v1601 = vpop.xlane.xlu0 %1600
    %1602 = vadd.xlane.f32.xlu0 %v1541
    %v1603 = vpop.xlane.xlu0 %1602
    %1604 = vadd.xlane.f32.xlu0 %v1542
    %v1605 = vpop.xlane.xlu0 %1604
    %1606 = vadd.xlane.f32.xlu0 %v1543
    %v1607 = vpop.xlane.xlu0 %1606
    %v1608 = vmul.f32 %v1449, 0.0078125
    %v1609 = vmul.f32 %v1451, 0.0078125
    %v1610 = vmul.f32 %v1453, 0.0078125
    %v1611 = vmul.f32 %v1455, 0.0078125
    %v1612 = vmul.f32 %v1457, 0.0078125
    %v1613 = vmul.f32 %v1459, 0.0078125
    %v1614 = vmul.f32 %v1461, 0.0078125
    %v1615 = vmul.f32 %v1463, 0.0078125
    %v1616 = vmul.f32 %v1465, 0.0078125
    %v1617 = vmul.f32 %v1467, 0.0078125
    %v1618 = vmul.f32 %v1469, 0.0078125
    %v1619 = vmul.f32 %v1471, 0.0078125
    %v1620 = vmul.f32 %v1473, 0.0078125
    %v1621 = vmul.f32 %v1475, 0.0078125
    %v1622 = vmul.f32 %v1477, 0.0078125
    %v1623 = vmul.f32 %v1479, 0.0078125
    %v1624 = vmul.f32 %v1481, 0.0078125
    %v1625 = vmul.f32 %v1483, 0.0078125
    %v1626 = vmul.f32 %v1485, 0.0078125
    %v1627 = vmul.f32 %v1487, 0.0078125
    %v1628 = vmul.f32 %v1489, 0.0078125
    %v1629 = vmul.f32 %v1491, 0.0078125
    %v1630 = vmul.f32 %v1493, 0.0078125
    %v1631 = vmul.f32 %v1495, 0.0078125
    %v1632 = vmul.f32 %v1497, 0.0078125
    %v1633 = vmul.f32 %v1499, 0.0078125
    %v1634 = vmul.f32 %v1501, 0.0078125
    %v1635 = vmul.f32 %v1503, 0.0078125
    %v1636 = vmul.f32 %v1505, 0.0078125
    %v1637 = vmul.f32 %v1507, 0.0078125
    %v1638 = vmul.f32 %v1509, 0.0078125
    %v1639 = vmul.f32 %v1511, 0.0078125
    %v1640 = vmul.f32 %v1545, 0.0078125
    %v1641 = vmul.f32 %v1547, 0.0078125
    %v1642 = vmul.f32 %v1549, 0.0078125
    %v1643 = vmul.f32 %v1551, 0.0078125
    %v1644 = vmul.f32 %v1553, 0.0078125
    %v1645 = vmul.f32 %v1555, 0.0078125
    %v1646 = vmul.f32 %v1557, 0.0078125
    %v1647 = vmul.f32 %v1559, 0.0078125
    %v1648 = vmul.f32 %v1561, 0.0078125
    %v1649 = vmul.f32 %v1563, 0.0078125
    %v1650 = vmul.f32 %v1565, 0.0078125
    %v1651 = vmul.f32 %v1567, 0.0078125
    %v1652 = vmul.f32 %v1569, 0.0078125
    %v1653 = vmul.f32 %v1571, 0.0078125
    %v1654 = vmul.f32 %v1573, 0.0078125
    %v1655 = vmul.f32 %v1575, 0.0078125
    %v1656 = vmul.f32 %v1577, 0.0078125
    %v1657 = vmul.f32 %v1579, 0.0078125
    %v1658 = vmul.f32 %v1581, 0.0078125
    %v1659 = vmul.f32 %v1583, 0.0078125
    %v1660 = vmul.f32 %v1585, 0.0078125
    %v1661 = vmul.f32 %v1587, 0.0078125
    %v1662 = vmul.f32 %v1589, 0.0078125
    %v1663 = vmul.f32 %v1591, 0.0078125
    %v1664 = vmul.f32 %v1593, 0.0078125
    %v1665 = vmul.f32 %v1595, 0.0078125
    %v1666 = vmul.f32 %v1597, 0.0078125
    %v1667 = vmul.f32 %v1599, 0.0078125
    %v1668 = vmul.f32 %v1601, 0.0078125
    %v1669 = vmul.f32 %v1603, 0.0078125
    %v1670 = vmul.f32 %v1605, 0.0078125
    %v1671 = vmul.f32 %v1607, 0.0078125
    %v1672 = vmul.f32 %v1608, %v1608
    %v1673 = vmul.f32 %v1609, %v1609
    %v1674 = vmul.f32 %v1610, %v1610
    %v1675 = vmul.f32 %v1611, %v1611
    %v1676 = vmul.f32 %v1612, %v1612
    %v1677 = vmul.f32 %v1613, %v1613
    %v1678 = vmul.f32 %v1614, %v1614
    %v1679 = vmul.f32 %v1615, %v1615
    %v1680 = vmul.f32 %v1616, %v1616
    %v1681 = vmul.f32 %v1617, %v1617
    %v1682 = vmul.f32 %v1618, %v1618
    %v1683 = vmul.f32 %v1619, %v1619
    %v1684 = vmul.f32 %v1620, %v1620
    %v1685 = vmul.f32 %v1621, %v1621
    %v1686 = vmul.f32 %v1622, %v1622
    %v1687 = vmul.f32 %v1623, %v1623
    %v1688 = vmul.f32 %v1624, %v1624
    %v1689 = vmul.f32 %v1625, %v1625
    %v1690 = vmul.f32 %v1626, %v1626
    %v1691 = vmul.f32 %v1627, %v1627
    %v1692 = vmul.f32 %v1628, %v1628
    %v1693 = vmul.f32 %v1629, %v1629
    %v1694 = vmul.f32 %v1630, %v1630
    %v1695 = vmul.f32 %v1631, %v1631
    %v1696 = vmul.f32 %v1632, %v1632
    %v1697 = vmul.f32 %v1633, %v1633
    %v1698 = vmul.f32 %v1634, %v1634
    %v1699 = vmul.f32 %v1635, %v1635
    %v1700 = vmul.f32 %v1636, %v1636
    %v1701 = vmul.f32 %v1637, %v1637
    %v1702 = vmul.f32 %v1638, %v1638
    %v1703 = vmul.f32 %v1639, %v1639
    %v1704 = vsub.f32 %v1640, %v1672
    %v1705 = vsub.f32 %v1641, %v1673
    %v1706 = vsub.f32 %v1642, %v1674
    %v1707 = vsub.f32 %v1643, %v1675
    %v1708 = vsub.f32 %v1644, %v1676
    %v1709 = vsub.f32 %v1645, %v1677
    %v1710 = vsub.f32 %v1646, %v1678
    %v1711 = vsub.f32 %v1647, %v1679
    %v1712 = vsub.f32 %v1648, %v1680
    %v1713 = vsub.f32 %v1649, %v1681
    %v1714 = vsub.f32 %v1650, %v1682
    %v1715 = vsub.f32 %v1651, %v1683
    %v1716 = vsub.f32 %v1652, %v1684
    %v1717 = vsub.f32 %v1653, %v1685
    %v1718 = vsub.f32 %v1654, %v1686
    %v1719 = vsub.f32 %v1655, %v1687
    %v1720 = vsub.f32 %v1656, %v1688
    %v1721 = vsub.f32 %v1657, %v1689
    %v1722 = vsub.f32 %v1658, %v1690
    %v1723 = vsub.f32 %v1659, %v1691
    %v1724 = vsub.f32 %v1660, %v1692
    %v1725 = vsub.f32 %v1661, %v1693
    %v1726 = vsub.f32 %v1662, %v1694
    %v1727 = vsub.f32 %v1663, %v1695
    %v1728 = vsub.f32 %v1664, %v1696
    %v1729 = vsub.f32 %v1665, %v1697
    %v1730 = vsub.f32 %v1666, %v1698
    %v1731 = vsub.f32 %v1667, %v1699
    %v1732 = vsub.f32 %v1668, %v1700
    %v1733 = vsub.f32 %v1669, %v1701
    %v1734 = vsub.f32 %v1670, %v1702
    %v1735 = vsub.f32 %v1671, %v1703
    %v1736 = vsub.f32 %v1416, %v1608
    %v1737 = vsub.f32 %v1417, %v1609
    %v1738 = vsub.f32 %v1418, %v1610
    %v1739 = vsub.f32 %v1419, %v1611
    %v1740 = vsub.f32 %v1420, %v1612
    %v1741 = vsub.f32 %v1421, %v1613
    %v1742 = vsub.f32 %v1422, %v1614
    %v1743 = vsub.f32 %v1423, %v1615
    %v1744 = vsub.f32 %v1424, %v1616
    %v1745 = vsub.f32 %v1425, %v1617
    %v1746 = vsub.f32 %v1426, %v1618
    %v1747 = vsub.f32 %v1427, %v1619
    %v1748 = vsub.f32 %v1428, %v1620
    %v1749 = vsub.f32 %v1429, %v1621
    %v1750 = vsub.f32 %v1430, %v1622
    %v1751 = vsub.f32 %v1431, %v1623
    %v1752 = vsub.f32 %v1432, %v1624
    %v1753 = vsub.f32 %v1433, %v1625
    %v1754 = vsub.f32 %v1434, %v1626
    %v1755 = vsub.f32 %v1435, %v1627
    %v1756 = vsub.f32 %v1436, %v1628
    %v1757 = vsub.f32 %v1437, %v1629
    %v1758 = vsub.f32 %v1438, %v1630
    %v1759 = vsub.f32 %v1439, %v1631
    %v1760 = vsub.f32 %v1440, %v1632
    %v1761 = vsub.f32 %v1441, %v1633
    %v1762 = vsub.f32 %v1442, %v1634
    %v1763 = vsub.f32 %v1443, %v1635
    %v1764 = vsub.f32 %v1444, %v1636
    %v1765 = vsub.f32 %v1445, %v1637
    %v1766 = vsub.f32 %v1446, %v1638
    %v1767 = vsub.f32 %v1447, %v1639
    %v1768 = vadd.f32 %v1704, 1e-05
    %v1769 = vadd.f32 %v1705, 1e-05
    %v1770 = vadd.f32 %v1706, 1e-05
    %v1771 = vadd.f32 %v1707, 1e-05
    %v1772 = vadd.f32 %v1708, 1e-05
    %v1773 = vadd.f32 %v1709, 1e-05
    %v1774 = vadd.f32 %v1710, 1e-05
    %v1775 = vadd.f32 %v1711, 1e-05
    %v1776 = vadd.f32 %v1712, 1e-05
    %v1777 = vadd.f32 %v1713, 1e-05
    %v1778 = vadd.f32 %v1714, 1e-05
    %v1779 = vadd.f32 %v1715, 1e-05
    %v1780 = vadd.f32 %v1716, 1e-05
    %v1781 = vadd.f32 %v1717, 1e-05
    %v1782 = vadd.f32 %v1718, 1e-05
    %v1783 = vadd.f32 %v1719, 1e-05
    %v1784 = vadd.f32 %v1720, 1e-05
    %v1785 = vadd.f32 %v1721, 1e-05
    %v1786 = vadd.f32 %v1722, 1e-05
    %v1787 = vadd.f32 %v1723, 1e-05
    %v1788 = vadd.f32 %v1724, 1e-05
    %v1789 = vadd.f32 %v1725, 1e-05
    %v1790 = vadd.f32 %v1726, 1e-05
    %v1791 = vadd.f32 %v1727, 1e-05
    %v1792 = vadd.f32 %v1728, 1e-05
    %v1793 = vadd.f32 %v1729, 1e-05
    %v1794 = vadd.f32 %v1730, 1e-05
    %v1795 = vadd.f32 %v1731, 1e-05
    %v1796 = vadd.f32 %v1732, 1e-05
    %v1797 = vadd.f32 %v1733, 1e-05
    %v1798 = vadd.f32 %v1734, 1e-05
    %v1799 = vadd.f32 %v1735, 1e-05
    %v1800 = vrsqrt.pop %v1768
    %v1801 = vrsqrt.pop %v1769
    %v1802 = vrsqrt.pop %v1770
    %v1803 = vrsqrt.pop %v1771
    %v1804 = vrsqrt.pop %v1772
    %v1805 = vrsqrt.pop %v1773
    %v1806 = vrsqrt.pop %v1774
    %v1807 = vrsqrt.pop %v1775
    %v1808 = vrsqrt.pop %v1776
    %v1809 = vrsqrt.pop %v1777
    %v1810 = vrsqrt.pop %v1778
    %v1811 = vrsqrt.pop %v1779
    %v1812 = vrsqrt.pop %v1780
    %v1813 = vrsqrt.pop %v1781
    %v1814 = vrsqrt.pop %v1782
    %v1815 = vrsqrt.pop %v1783
    %v1816 = vrsqrt.pop %v1784
    %v1817 = vrsqrt.pop %v1785
    %v1818 = vrsqrt.pop %v1786
    %v1819 = vrsqrt.pop %v1787
    %v1820 = vrsqrt.pop %v1788
    %v1821 = vrsqrt.pop %v1789
    %v1822 = vrsqrt.pop %v1790
    %v1823 = vrsqrt.pop %v1791
    %v1824 = vrsqrt.pop %v1792
    %v1825 = vrsqrt.pop %v1793
    %v1826 = vrsqrt.pop %v1794
    %v1827 = vrsqrt.pop %v1795
    %v1828 = vrsqrt.pop %v1796
    %v1829 = vrsqrt.pop %v1797
    %v1830 = vrsqrt.pop %v1798
    %v1831 = vrsqrt.pop %v1799
    %v1832 = vmul.f32 %v1736, %v1800
    %v1833 = vmul.f32 %v1737, %v1801
    %v1834 = vmul.f32 %v1738, %v1802
    %v1835 = vmul.f32 %v1739, %v1803
    %v1836 = vmul.f32 %v1740, %v1804
    %v1837 = vmul.f32 %v1741, %v1805
    %v1838 = vmul.f32 %v1742, %v1806
    %v1839 = vmul.f32 %v1743, %v1807
    %v1840 = vmul.f32 %v1744, %v1808
    %v1841 = vmul.f32 %v1745, %v1809
    %v1842 = vmul.f32 %v1746, %v1810
    %v1843 = vmul.f32 %v1747, %v1811
    %v1844 = vmul.f32 %v1748, %v1812
    %v1845 = vmul.f32 %v1749, %v1813
    %v1846 = vmul.f32 %v1750, %v1814
    %v1847 = vmul.f32 %v1751, %v1815
    %v1848 = vmul.f32 %v1752, %v1816
    %v1849 = vmul.f32 %v1753, %v1817
    %v1850 = vmul.f32 %v1754, %v1818
    %v1851 = vmul.f32 %v1755, %v1819
    %v1852 = vmul.f32 %v1756, %v1820
    %v1853 = vmul.f32 %v1757, %v1821
    %v1854 = vmul.f32 %v1758, %v1822
    %v1855 = vmul.f32 %v1759, %v1823
    %v1856 = vmul.f32 %v1760, %v1824
    %v1857 = vmul.f32 %v1761, %v1825
    %v1858 = vmul.f32 %v1762, %v1826
    %v1859 = vmul.f32 %v1763, %v1827
    %v1860 = vmul.f32 %v1764, %v1828
    %v1861 = vmul.f32 %v1765, %v1829
    %v1862 = vmul.f32 %v1766, %v1830
    %v1863 = vmul.f32 %v1767, %v1831
    %v1864 = vld [vmem:[#allocation7 + $0x1] sm:$0x1]
    %v1865 = vlaneseq
    %v1866 = vshrl.u32 %v1865, 7
    %v1867 = vsub.s32 0, %v1866
    %v1868 = vrot.slane %v1864, %v1867
    %v1869 = vmul.f32 %v1832, %v1868
    %v1870 = vmul.f32 %v1833, %v1868
    %v1871 = vmul.f32 %v1834, %v1868
    %v1872 = vmul.f32 %v1835, %v1868
    %v1873 = vmul.f32 %v1836, %v1868
    %v1874 = vmul.f32 %v1837, %v1868
    %v1875 = vmul.f32 %v1838, %v1868
    %v1876 = vmul.f32 %v1839, %v1868
    %v1877 = vmul.f32 %v1840, %v1868
    %v1878 = vmul.f32 %v1841, %v1868
    %v1879 = vmul.f32 %v1842, %v1868
    %v1880 = vmul.f32 %v1843, %v1868
    %v1881 = vmul.f32 %v1844, %v1868
    %v1882 = vmul.f32 %v1845, %v1868
    %v1883 = vmul.f32 %v1846, %v1868
    %v1884 = vmul.f32 %v1847, %v1868
    %v1885 = vmul.f32 %v1848, %v1868
    %v1886 = vmul.f32 %v1849, %v1868
    %v1887 = vmul.f32 %v1850, %v1868
    %v1888 = vmul.f32 %v1851, %v1868
    %v1889 = vmul.f32 %v1852, %v1868
    %v1890 = vmul.f32 %v1853, %v1868
    %v1891 = vmul.f32 %v1854, %v1868
    %v1892 = vmul.f32 %v1855, %v1868
    %v1893 = vmul.f32 %v1856, %v1868
    %v1894 = vmul.f32 %v1857, %v1868
    %v1895 = vmul.f32 %v1858, %v1868
    %v1896 = vmul.f32 %v1859, %v1868
    %v1897 = vmul.f32 %v1860, %v1868
    %v1898 = vmul.f32 %v1861, %v1868
    %v1899 = vmul.f32 %v1862, %v1868
    %v1900 = vmul.f32 %v1863, %v1868
    %v1901 = vld [vmem:[#allocation7 + $0x2] sm:$0x1]
    %v1902 = vlaneseq
    %v1903 = vshrl.u32 %v1902, 7
    %v1904 = vsub.s32 0, %v1903
    %v1905 = vrot.slane %v1901, %v1904
    %v1906 = vadd.f32 %v1869, %v1905
    %v1907 = vadd.f32 %v1870, %v1905
    %v1908 = vadd.f32 %v1871, %v1905
    %v1909 = vadd.f32 %v1872, %v1905
    %v1910 = vadd.f32 %v1873, %v1905
    %v1911 = vadd.f32 %v1874, %v1905
    %v1912 = vadd.f32 %v1875, %v1905
    %v1913 = vadd.f32 %v1876, %v1905
    %v1914 = vadd.f32 %v1877, %v1905
    %v1915 = vadd.f32 %v1878, %v1905
    %v1916 = vadd.f32 %v1879, %v1905
    %v1917 = vadd.f32 %v1880, %v1905
    %v1918 = vadd.f32 %v1881, %v1905
    %v1919 = vadd.f32 %v1882, %v1905
    %v1920 = vadd.f32 %v1883, %v1905
    %v1921 = vadd.f32 %v1884, %v1905
    %v1922 = vadd.f32 %v1885, %v1905
    %v1923 = vadd.f32 %v1886, %v1905
    %v1924 = vadd.f32 %v1887, %v1905
    %v1925 = vadd.f32 %v1888, %v1905
    %v1926 = vadd.f32 %v1889, %v1905
    %v1927 = vadd.f32 %v1890, %v1905
    %v1928 = vadd.f32 %v1891, %v1905
    %v1929 = vadd.f32 %v1892, %v1905
    %v1930 = vadd.f32 %v1893, %v1905
    %v1931 = vadd.f32 %v1894, %v1905
    %v1932 = vadd.f32 %v1895, %v1905
    %v1933 = vadd.f32 %v1896, %v1905
    %v1934 = vadd.f32 %v1897, %v1905
    %v1935 = vadd.f32 %v1898, %v1905
    %v1936 = vadd.f32 %v1899, %v1905
    %v1937 = vadd.f32 %v1900, %v1905
    %v1938 = vmax.f32 %v1906, 0.0
    %v1939 = vmax.f32 %v1907, 0.0
    %v1940 = vmax.f32 %v1908, 0.0
    %v1941 = vmax.f32 %v1909, 0.0
    %v1942 = vmax.f32 %v1910, 0.0
    %v1943 = vmax.f32 %v1911, 0.0
    %v1944 = vmax.f32 %v1912, 0.0
    %v1945 = vmax.f32 %v1913, 0.0
    %v1946 = vmax.f32 %v1914, 0.0
    %v1947 = vmax.f32 %v1915, 0.0
    %v1948 = vmax.f32 %v1916, 0.0
    %v1949 = vmax.f32 %v1917, 0.0
    %v1950 = vmax.f32 %v1918, 0.0
    %v1951 = vmax.f32 %v1919, 0.0
    %v1952 = vmax.f32 %v1920, 0.0
    %v1953 = vmax.f32 %v1921, 0.0
    %v1954 = vmax.f32 %v1922, 0.0
    %v1955 = vmax.f32 %v1923, 0.0
    %v1956 = vmax.f32 %v1924, 0.0
    %v1957 = vmax.f32 %v1925, 0.0
    %v1958 = vmax.f32 %v1926, 0.0
    %v1959 = vmax.f32 %v1927, 0.0
    %v1960 = vmax.f32 %v1928, 0.0
    %v1961 = vmax.f32 %v1929, 0.0
    %v1962 = vmax.f32 %v1930, 0.0
    %v1963 = vmax.f32 %v1931, 0.0
    %v1964 = vmax.f32 %v1932, 0.0
    %v1965 = vmax.f32 %v1933, 0.0
    %v1966 = vmax.f32 %v1934, 0.0
    %v1967 = vmax.f32 %v1935, 0.0
    %v1968 = vmax.f32 %v1936, 0.0
    %v1969 = vmax.f32 %v1937, 0.0
    %1970 = vst [vmem:[#allocation8] sm:$0xff] %v1938
    %1971 = vst [vmem:[#allocation8 + $0x8] sm:$0xff] %v1939
    %1972 = vst [vmem:[#allocation8 + $0x10] sm:$0xff] %v1940
    %1973 = vst [vmem:[#allocation8 + $0x18] sm:$0xff] %v1941
    %1974 = vst [vmem:[#allocation8 + $0x20] sm:$0xff] %v1942
    %1975 = vst [vmem:[#allocation8 + $0x28] sm:$0xff] %v1943
    %1976 = vst [vmem:[#allocation8 + $0x30] sm:$0xff] %v1944
    %1977 = vst [vmem:[#allocation8 + $0x38] sm:$0xff] %v1945
    %1978 = vst [vmem:[#allocation8 + $0x40] sm:$0xff] %v1946
    %1979 = vst [vmem:[#allocation8 + $0x48] sm:$0xff] %v1947
    %1980 = vst [vmem:[#allocation8 + $0x50] sm:$0xff] %v1948
    %1981 = vst [vmem:[#allocation8 + $0x58] sm:$0xff] %v1949
    %1982 = vst [vmem:[#allocation8 + $0x60] sm:$0xff] %v1950
    %1983 = vst [vmem:[#allocation8 + $0x68] sm:$0xff] %v1951
    %1984 = vst [vmem:[#allocation8 + $0x70] sm:$0xff] %v1952
    %1985 = vst [vmem:[#allocation8 + $0x78] sm:$0xff] %v1953
    %1986 = vst [vmem:[#allocation8 + $0x80] sm:$0xff] %v1954
    %1987 = vst [vmem:[#allocation8 + $0x88] sm:$0xff] %v1955
    %1988 = vst [vmem:[#allocation8 + $0x90] sm:$0xff] %v1956
    %1989 = vst [vmem:[#allocation8 + $0x98] sm:$0xff] %v1957
    %1990 = vst [vmem:[#allocation8 + $0xa0] sm:$0xff] %v1958
    %1991 = vst [vmem:[#allocation8 + $0xa8] sm:$0xff] %v1959
    %1992 = vst [vmem:[#allocation8 + $0xb0] sm:$0xff] %v1960
    %1993 = vst [vmem:[#allocation8 + $0xb8] sm:$0xff] %v1961
    %1994 = vst [vmem:[#allocation8 + $0xc0] sm:$0xff] %v1962
    %1995 = vst [vmem:[#allocation8 + $0xc8] sm:$0xff] %v1963
    %1996 = vst [vmem:[#allocation8 + $0xd0] sm:$0xff] %v1964
    %1997 = vst [vmem:[#allocation8 + $0xd8] sm:$0xff] %v1965
    %1998 = vst [vmem:[#allocation8 + $0xe0] sm:$0xff] %v1966
    %1999 = vst [vmem:[#allocation8 + $0xe8] sm:$0xff] %v1967
    %2000 = vst [vmem:[#allocation8 + $0xf0] sm:$0xff] %v1968
    %2001 = vst [vmem:[#allocation8 + $0xf8] sm:$0xff] %v1969
    // Predicated region
    $region26: #{tpu_custom_call.1} parent=1 // pred_check
      _
    $region27: #{tpu_custom_call.1} parent=1 // pred_check_branch
      %2003 = sbr.rel (0) target = $region29
    $region28: #{tpu_custom_call.1} parent=1 // pred_region
      %s2005 = ssub.s32 4096, 4096
      %2006 = vsyncadd [#allocation4], %s2005
      %s2007 = sshll.u32 [#allocation8], 4
      %s2008 = int_to_ptr.vmem [resolvable:$true] %s2007
      %2013 = dma.vmem_to_hbm [thread:$0]  %s2008, 4096, %s3, [#allocation4], 128, 128, 8
    $region29: #{tpu_custom_call.1} parent=1 // pred_fallthru
      _
    // Predicated region
    $region30: #{tpu_custom_call.1} parent=1 // pred_check
      _
    $region31: #{tpu_custom_call.1} parent=1 // pred_check_branch
      %2015 = sbr.rel (0) target = $region33
    $region32: #{tpu_custom_call.1} parent=1 // pred_region
      %2016 = dma.done [#allocation4], 4096
    $region33: #{tpu_custom_call.1} parent=1 // pred_fallthru
      _
    %2017 = vsyncpa [#allocation3], 1
    %2018 = vsyncpa [#allocation6], 1
    %2019 = vsyncpa [#allocation4], 1

</llo_original>
